<compile_context>
chip_gen: v5e
topology: v5e:2x2
jax: 0.10.0
libtpu: 0.0.40
codegen_flags: <defaults>
</compile_context>

<pallas_src>
import jax
import jax.numpy as jnp
from jax.experimental import pallas as pl
from jax.experimental.pallas import tpu as pltpu

D_IN = 800
D_H1 = 512
D_H2 = 128
LANE = 128
SUBLANE = 8


def _round_up(x, m):
    return (x + m - 1) // m * m


def _mlp_kernel(x_ref, w1_ref, b1_ref, w2_ref, b2_ref, w3_ref, b3_ref, o_ref):
    # Layer 1: (TM, 896) bf16 @ (896, 512) bf16 -> f32 acc, + bias, ReLU
    h1 = jnp.dot(x_ref[...], w1_ref[...], preferred_element_type=jnp.float32)
    h1 = jnp.maximum(h1 + b1_ref[...], 0.0)
    # Layer 2: (TM, 512) bf16 @ (512, 128) bf16 -> f32 acc, + bias, ReLU
    h2 = jnp.dot(h1.astype(jnp.bfloat16), w2_ref[...],
                 preferred_element_type=jnp.float32)
    h2 = jnp.maximum(h2 + b2_ref[...], 0.0)
    # Layer 3: N=1 matmul replaced by VPU multiply + XLU lane reduction
    w3_row = w3_ref[...].astype(jnp.float32)                # (1, 128)
    logits = jnp.sum(h2 * w3_row, axis=-1, keepdims=True) + b3_ref[...]
    o_ref[...] = jax.nn.sigmoid(logits).astype(o_ref.dtype)


def init_params(key):
    """PyTorch-style init. Weights stored as (in, out) = transpose of nn.Linear."""
    dims = [(D_IN, D_H1), (D_H1, D_H2), (D_H2, 1)]
    params = []
    for fan_in, fan_out in dims:
        key, kw, kb = jax.random.split(key, 3)
        bound = 1.0 / (fan_in ** 0.5)
        w = jax.random.uniform(kw, (fan_in, fan_out), jnp.float32, -bound, bound)
        b = jax.random.uniform(kb, (fan_out,), jnp.float32, -bound, bound)
        params.extend([w, b])
    return tuple(params)


def prepare_params(params):
    """Pad/cast f32 params once for the kernel: bf16 weights (K padded), f32 biases."""
    w1, b1, w2, b2, w3, b3 = params
    k_pad = _round_up(D_IN, LANE)                            # 800 -> 896
    w1p = jnp.pad(w1, ((0, k_pad - D_IN), (0, 0))).astype(jnp.bfloat16)
    w2p = w2.astype(jnp.bfloat16)
    w3p = w3.reshape(1, D_H2).astype(jnp.bfloat16)           # (1, 128) row
    return (w1p, b1.reshape(1, D_H1).astype(jnp.float32),
            w2p, b2.reshape(1, D_H2).astype(jnp.float32),
            w3p, b3.reshape(1, 1).astype(jnp.float32))


def net_discriminator_forward(x, kernel_params, tm=1024):
    """x: (B, 800) float32.  Returns (B,) float32, matching .view(-1)."""
    w1p, b1p, w2p, b2p, w3p, b3p = kernel_params
    B = x.shape[0]
    k_pad = w1p.shape[0]

    # Batch tile: shrink for small B, pad B up to a multiple of the tile.
    tm = min(tm, max(SUBLANE, _round_up(B, SUBLANE)))
    b_pad = _round_up(B, tm)

    xp = jnp.pad(x, ((0, b_pad - B), (0, k_pad - D_IN))).astype(jnp.bfloat16)

    flops = 2 * b_pad * (k_pad * D_H1 + D_H1 * D_H2 + D_H2)
    bytes_accessed = (xp.size * 2 + w1p.size * 2 + w2p.size * 2 + w3p.size * 2
                      + (D_H1 + D_H2 + 1) * 4 + b_pad * 4)

    out = pl.pallas_call(
        _mlp_kernel,
        out_shape=jax.ShapeDtypeStruct((b_pad, 1), jnp.float32),
        grid_spec=pltpu.PrefetchScalarGridSpec(
            num_scalar_prefetch=0,
            grid=(b_pad // tm,),
            in_specs=[
                pl.BlockSpec((tm, k_pad), lambda i: (i, 0)),    # x tile (pipelined)
                pl.BlockSpec((k_pad, D_H1), lambda i: (0, 0)),  # w1 (resident)
                pl.BlockSpec((1, D_H1), lambda i: (0, 0)),      # b1
                pl.BlockSpec((D_H1, D_H2), lambda i: (0, 0)),   # w2 (resident)
                pl.BlockSpec((1, D_H2), lambda i: (0, 0)),      # b2
                pl.BlockSpec((1, D_H2), lambda i: (0, 0)),      # w3 as (1,128) row
                pl.BlockSpec((1, 1), lambda i: (0, 0)),         # b3
            ],
            out_specs=pl.BlockSpec((tm, 1), lambda i: (i, 0)),
        ),
        compiler_params=pltpu.CompilerParams(
            dimension_semantics=("parallel",)),
        cost_estimate=pl.CostEstimate(
            flops=flops, transcendentals=b_pad, bytes_accessed=bytes_accessed),
    )(xp, w1p, b1p, w2p, b2p, w3p, b3p)

    return out[:B, 0]


def reference_forward(x, params):
    w1, b1, w2, b2, w3, b3 = params
    h1 = jnp.maximum(x @ w1 + b1, 0.0)
    h2 = jnp.maximum(h1 @ w2 + b2, 0.0)
    return jax.nn.sigmoid(h2 @ w3 + b3).reshape(-1)


if __name__ == "__main__":
    key = jax.random.PRNGKey(0)
    key, kx = jax.random.split(key)

    params = init_params(key)
    kparams = prepare_params(params)

    # Small-batch check (B=2, single padded tile).
    B = 2
    x = jax.random.normal(kx, (B, D_IN), jnp.float32)
    out = jax.block_until_ready(net_discriminator_forward(x, kparams))
    ref = reference_forward(x, params)
    assert out.shape == (B,), out.shape
    assert jnp.allclose(out, ref, atol=3e-2), (out, ref)

    # Multi-tile + uneven-batch check (B=260 with TM=128 -> 3 grid steps, padding sliced).
    B2 = 260
    x2 = jax.random.normal(jax.random.PRNGKey(1), (B2, D_IN), jnp.float32)
    out2 = jax.block_until_ready(net_discriminator_forward(x2, kparams, tm=128))
    ref2 = reference_forward(x2, params)
    assert out2.shape == (B2,), out2.shape
    assert jnp.allclose(out2, ref2, atol=3e-2), (out2, ref2)

    print("KERNEL_OK")
</pallas_src>

<mosaic_0001>
module attributes {stable_mosaic.version = 11 : i64} {
  func.func @_mlp_kernel(%arg0: i32, %arg1: memref<8x896xbf16, #tpu.memory_space<vmem>>, %arg2: memref<896x512xbf16, #tpu.memory_space<vmem>>, %arg3: memref<1x512xf32, #tpu.memory_space<vmem>>, %arg4: memref<512x128xbf16, #tpu.memory_space<vmem>>, %arg5: memref<1x128xf32, #tpu.memory_space<vmem>>, %arg6: memref<1x128xbf16, #tpu.memory_space<vmem>>, %arg7: memref<1x1xf32, #tpu.memory_space<vmem>>, %arg8: memref<8x1xf32, #tpu.memory_space<vmem>>) attributes {dimension_semantics = [#tpu.dimension_semantics<parallel>], iteration_bounds = array<i64: 1>, scalar_prefetch = 0 : i64, scratch_operands = 0 : i64, tpu.core_type = #tpu.core_type<tc>, window_params = [{transform_indices = @transform_0, window_bounds = array<i64: 8, 896>}, {pipeline_mode = #tpu.pipeline_mode<synchronous>, transform_indices = @transform_1, window_bounds = array<i64: 896, 512>}, {pipeline_mode = #tpu.pipeline_mode<synchronous>, transform_indices = @transform_2, window_bounds = array<i64: 1, 512>}, {pipeline_mode = #tpu.pipeline_mode<synchronous>, transform_indices = @transform_3, window_bounds = array<i64: 512, 128>}, {pipeline_mode = #tpu.pipeline_mode<synchronous>, transform_indices = @transform_4, window_bounds = array<i64: 1, 128>}, {pipeline_mode = #tpu.pipeline_mode<synchronous>, transform_indices = @transform_5, window_bounds = array<i64: 1, 128>}, {pipeline_mode = #tpu.pipeline_mode<synchronous>, transform_indices = @transform_6, window_bounds = array<i64: 1, 1>}, {transform_indices = @transform_7, window_bounds = array<i64: 8, 1>}]} {
    %c0 = arith.constant 0 : index
    %c0_0 = arith.constant 0 : index
    %0 = vector.load %arg1[%c0, %c0_0] : memref<8x896xbf16, #tpu.memory_space<vmem>>, vector<8x896xbf16>
    %c0_1 = arith.constant 0 : index
    %c0_2 = arith.constant 0 : index
    %1 = vector.load %arg2[%c0_1, %c0_2] : memref<896x512xbf16, #tpu.memory_space<vmem>>, vector<896x512xbf16>
    %cst = arith.constant dense<0.000000e+00> : vector<8x512xf32>
    %2 = tpu.matmul %0, %1, %cst {dimension_numbers = #tpu.dot_dimension_numbers<[1], [0], [0], [1], [0, 0, 1, 1], [], []>} : vector<8x896xbf16>, vector<896x512xbf16>, vector<8x512xf32> -> vector<8x512xf32>
    %c0_3 = arith.constant 0 : index
    %c0_4 = arith.constant 0 : index
    %3 = vector.load %arg3[%c0_3, %c0_4] : memref<1x512xf32, #tpu.memory_space<vmem>>, vector<1x512xf32>
    %4 = vector.broadcast %3 : vector<1x512xf32> to vector<8x512xf32>
    %5 = arith.addf %2, %4 : vector<8x512xf32>
    %cst_5 = arith.constant 0.000000e+00 : f32
    %6 = vector.broadcast %cst_5 : f32 to vector<8x512xf32>
    %7 = arith.maximumf %5, %6 : vector<8x512xf32>
    %8 = arith.truncf %7 : vector<8x512xf32> to vector<8x512xbf16>
    %c0_6 = arith.constant 0 : index
    %c0_7 = arith.constant 0 : index
    %9 = vector.load %arg4[%c0_6, %c0_7] : memref<512x128xbf16, #tpu.memory_space<vmem>>, vector<512x128xbf16>
    %cst_8 = arith.constant dense<0.000000e+00> : vector<8x128xf32>
    %10 = tpu.matmul %8, %9, %cst_8 {dimension_numbers = #tpu.dot_dimension_numbers<[1], [0], [0], [1], [0, 0, 1, 1], [], []>} : vector<8x512xbf16>, vector<512x128xbf16>, vector<8x128xf32> -> vector<8x128xf32>
    %c0_9 = arith.constant 0 : index
    %c0_10 = arith.constant 0 : index
    %11 = vector.load %arg5[%c0_9, %c0_10] : memref<1x128xf32, #tpu.memory_space<vmem>>, vector<1x128xf32>
    %12 = vector.broadcast %11 : vector<1x128xf32> to vector<8x128xf32>
    %13 = arith.addf %10, %12 : vector<8x128xf32>
    %cst_11 = arith.constant 0.000000e+00 : f32
    %14 = vector.broadcast %cst_11 : f32 to vector<8x128xf32>
    %15 = arith.maximumf %13, %14 : vector<8x128xf32>
    %c0_12 = arith.constant 0 : index
    %c0_13 = arith.constant 0 : index
    %16 = vector.load %arg6[%c0_12, %c0_13] : memref<1x128xbf16, #tpu.memory_space<vmem>>, vector<1x128xbf16>
    %17 = arith.extf %16 : vector<1x128xbf16> to vector<1x128xf32>
    %18 = vector.broadcast %17 : vector<1x128xf32> to vector<8x128xf32>
    %19 = arith.mulf %15, %18 : vector<8x128xf32>
    %cst_14 = arith.constant dense<0.000000e+00> : vector<8xf32>
    %20 = vector.multi_reduction <add>, %19, %cst_14 [1] : vector<8x128xf32> to vector<8xf32>
    %21 = vector.shape_cast %20 : vector<8xf32> to vector<8x1xf32>
    %c0_15 = arith.constant 0 : index
    %c0_16 = arith.constant 0 : index
    %22 = vector.load %arg7[%c0_15, %c0_16] : memref<1x1xf32, #tpu.memory_space<vmem>>, vector<1x1xf32>
    %23 = vector.broadcast %22 : vector<1x1xf32> to vector<8x1xf32>
    %24 = arith.addf %21, %23 : vector<8x1xf32>
    %25 = arith.negf %24 : vector<8x1xf32>
    %26 = math.exp %25 : vector<8x1xf32>
    %cst_17 = arith.constant 1.000000e+00 : f32
    %27 = vector.broadcast %cst_17 : f32 to vector<8x1xf32>
    %28 = arith.addf %27, %26 : vector<8x1xf32>
    %29 = arith.divf %27, %28 : vector<8x1xf32>
    %c0_18 = arith.constant 0 : index
    %c0_19 = arith.constant 0 : index
    %30 = vector.load %arg8[%c0_18, %c0_19] : memref<8x1xf32, #tpu.memory_space<vmem>>, vector<8x1xf32>
    tpu.vector_store %arg8[%c0_18, %c0_19], %29 {strides = array<i32>} : memref<8x1xf32, #tpu.memory_space<vmem>>, vector<8x1xf32>,
    return
  }
  func.func @transform_0(%arg0: i32) -> (i32, i32) {
    %c0_i32 = arith.constant 0 : i32
    %c0_i32_0 = arith.constant 0 : i32
    return %arg0, %c0_i32 : i32, i32
  }
  func.func @transform_1(%arg0: i32) -> (i32, i32) {
    %c0_i32 = arith.constant 0 : i32
    %c0_i32_0 = arith.constant 0 : i32
    %c0_i32_1 = arith.constant 0 : i32
    return %c0_i32, %c0_i32_0 : i32, i32
  }
  func.func @transform_2(%arg0: i32) -> (i32, i32) {
    %c0_i32 = arith.constant 0 : i32
    %c0_i32_0 = arith.constant 0 : i32
    %c0_i32_1 = arith.constant 0 : i32
    return %c0_i32, %c0_i32_0 : i32, i32
  }
  func.func @transform_3(%arg0: i32) -> (i32, i32) {
    %c0_i32 = arith.constant 0 : i32
    %c0_i32_0 = arith.constant 0 : i32
    %c0_i32_1 = arith.constant 0 : i32
    return %c0_i32, %c0_i32_0 : i32, i32
  }
  func.func @transform_4(%arg0: i32) -> (i32, i32) {
    %c0_i32 = arith.constant 0 : i32
    %c0_i32_0 = arith.constant 0 : i32
    %c0_i32_1 = arith.constant 0 : i32
    return %c0_i32, %c0_i32_0 : i32, i32
  }
  func.func @transform_5(%arg0: i32) -> (i32, i32) {
    %c0_i32 = arith.constant 0 : i32
    %c0_i32_0 = arith.constant 0 : i32
    %c0_i32_1 = arith.constant 0 : i32
    return %c0_i32, %c0_i32_0 : i32, i32
  }
  func.func @transform_6(%arg0: i32) -> (i32, i32) {
    %c0_i32 = arith.constant 0 : i32
    %c0_i32_0 = arith.constant 0 : i32
    %c0_i32_1 = arith.constant 0 : i32
    return %c0_i32, %c0_i32_0 : i32, i32
  }
  func.func @transform_7(%arg0: i32) -> (i32, i32) {
    %c0_i32 = arith.constant 0 : i32
    %c0_i32_0 = arith.constant 0 : i32
    return %arg0, %c0_i32 : i32, i32
  }
}

</mosaic_0001>

<llo_original>
// kernel: tpu_custom_call.1
$region0: #{tpu_custom_call.1}
  #allocation0 [shape = 'u32[]', space=smem, size = 0x4, offset = 0x4, fixed_abs, tag = 'smem constant byte address 0x4 - core index']
  #allocation1 [shape = 'u32[72,128]{1,0:T(1,128)}', space=vmem, size = 0x9000, scoped, tag = 'internal scratch']
  #allocation2 [shape = 'f32[1,1]{1,0:T(1,128)S(1)}', space=vmem, size = 0x200, scoped, tag = 'scoped memory for tpu_custom_call.1']
  %s0 = inlined_call_operand.hbm [shape: bf16[8,896], index: 0, kind: input, shape index: {}]
  %s1 = inlined_call_operand.hbm [shape: bf16[896,512], index: 1, kind: input, shape index: {}]
  %s2 = inlined_call_operand.hbm [shape: f32[1,512], index: 2, kind: input, shape index: {}]
  %s3 = inlined_call_operand.hbm [shape: bf16[512,128], index: 3, kind: input, shape index: {}]
  %s4 = inlined_call_operand.vmem [shape: f32[1,128], index: 4, kind: input, shape index: {}]
  %s5 = inlined_call_operand.vmem [shape: bf16[1,128], index: 5, kind: input, shape index: {}]
  %s6 = inlined_call_operand.<no memory space> [shape: f32[1,1], index: 6, kind: input, shape index: {}]
  %s7 = inlined_call_operand.vmem [shape: f32[8,1], index: 7, kind: output, shape index: {}]
  %s8 = sld [smem:[#allocation0]]
  $region54: #{tpu_custom_call.1} parent=0
    _
  %s10 = ssub.s32 1, %s8
  %s11 = scalar_select 0, %s10, %s8
  %v12 = vstv %s6
  %13 = vst [vmem:[#allocation2] sm:$0x1] %v12
  $region1: #{tpu_custom_call.1} parent=0
    #allocation3 [shape = 'u8[14336]{0}', space=vmem, size = 0x3800, scoped, tag = 'input window, operand 0, single buffered']
    #allocation4 [shape = 's32[1]{0}', space=sflag, size = 0x4, scoped, tag = 'scoped memory for tpu_custom_call.1']
    #allocation5 [shape = 'u8[917504]{0}', space=vmem, size = 0xe0000, scoped, tag = 'input window, operand 1, single buffered']
    #allocation6 [shape = 's32[1]{0}', space=sflag, size = 0x4, scoped, tag = 'scoped memory for tpu_custom_call.1']
    #allocation7 [shape = 'u8[2048]{0}', space=vmem, size = 0x800, scoped, tag = 'input window, operand 2, single buffered']
    #allocation8 [shape = 'u8[131072]{0}', space=vmem, size = 0x20000, scoped, tag = 'input window, operand 3, single buffered']
    #allocation9 [shape = 's32[1]{0}', space=sflag, size = 0x4, scoped, tag = 'scoped memory for tpu_custom_call.1']
    %14 = vsyncpa [#allocation4], 0
    %15 = vsyncpa [#allocation6], 0
    %16 = vsyncpa [#allocation9], 0
    // Predicated region
    $region2: #{tpu_custom_call.1} parent=1 // pred_check
      _
    $region3: #{tpu_custom_call.1} parent=1 // pred_check_branch
      %18 = sbr.rel (0) target = $region5
    $region4: #{tpu_custom_call.1} parent=1 // pred_region
      %20 = vsyncadd [#allocation4], 0
      %s22 = sshll.u32 %s0, 4
      %s23 = int_to_ptr.hbm [resolvable:$true] %s22
      %s24 = sshll.u32 [#allocation3], 4
      %s25 = int_to_ptr.vmem [resolvable:$true] %s24
      %27 = dma.hbm_to_vmem [thread:$0]  %s23, 448, %s25, [#allocation4]
    $region5: #{tpu_custom_call.1} parent=1 // pred_fallthru
      _
    // Predicated region
    $region6: #{tpu_custom_call.1} parent=1 // pred_check
      _
    $region7: #{tpu_custom_call.1} parent=1 // pred_check_branch
      %29 = sbr.rel (0) target = $region9
    $region8: #{tpu_custom_call.1} parent=1 // pred_region
      %31 = vsyncadd [#allocation6], 0
      %s32 = sshll.u32 %s1, 4
      %s33 = int_to_ptr.hbm [resolvable:$true] %s32
      %s34 = sshll.u32 [#allocation5], 4
      %s35 = int_to_ptr.vmem [resolvable:$true] %s34
      %40 = dma.hbm_to_vmem [thread:$0]  %s33, 28672, %s35, [#allocation6], 256, 256, 16
    $region9: #{tpu_custom_call.1} parent=1 // pred_fallthru
      _
    // Predicated region
    $region10: #{tpu_custom_call.1} parent=1 // pred_check
      _
    $region11: #{tpu_custom_call.1} parent=1 // pred_check_branch
      %42 = sbr.rel (0) target = $region13
    $region12: #{tpu_custom_call.1} parent=1 // pred_region
      %44 = vsyncadd [#allocation6], 0
      %s46 = sshll.u32 %s2, 4
      %s47 = int_to_ptr.hbm [resolvable:$true] %s46
      %s48 = sshll.u32 [#allocation7], 4
      %s49 = int_to_ptr.vmem [resolvable:$true] %s48
      %51 = dma.hbm_to_vmem [thread:$0]  %s47, 64, %s49, [#allocation6]
    $region13: #{tpu_custom_call.1} parent=1 // pred_fallthru
      _
    // Predicated region
    $region14: #{tpu_custom_call.1} parent=1 // pred_check
      _
    $region15: #{tpu_custom_call.1} parent=1 // pred_check_branch
      %53 = sbr.rel (0) target = $region17
    $region16: #{tpu_custom_call.1} parent=1 // pred_region
      %55 = vsyncadd [#allocation9], 0
      %s56 = sshll.u32 %s3, 4
      %s57 = int_to_ptr.hbm [resolvable:$true] %s56
      %s58 = sshll.u32 [#allocation8], 4
      %s59 = int_to_ptr.vmem [resolvable:$true] %s58
      %64 = dma.hbm_to_vmem [thread:$0]  %s57, 4096, %s59, [#allocation9], 64, 64, 4
    $region17: #{tpu_custom_call.1} parent=1 // pred_fallthru
      _
    // Predicated region
    $region18: #{tpu_custom_call.1} parent=1 // pred_check
      _
    $region19: #{tpu_custom_call.1} parent=1 // pred_check_branch
      %66 = sbr.rel (0) target = $region21
    $region20: #{tpu_custom_call.1} parent=1 // pred_region
      _
    $region21: #{tpu_custom_call.1} parent=1 // pred_fallthru
      _
    // Predicated region
    $region22: #{tpu_custom_call.1} parent=1 // pred_check
      _
    $region23: #{tpu_custom_call.1} parent=1 // pred_check_branch
      %68 = sbr.rel (0) target = $region25
    $region24: #{tpu_custom_call.1} parent=1 // pred_region
      _
    $region25: #{tpu_custom_call.1} parent=1 // pred_fallthru
      _
    // Predicated region
    $region26: #{tpu_custom_call.1} parent=1 // pred_check
      _
    $region27: #{tpu_custom_call.1} parent=1 // pred_check_branch
      %70 = sbr.rel (0) target = $region29
    $region28: #{tpu_custom_call.1} parent=1 // pred_region
      _
    $region29: #{tpu_custom_call.1} parent=1 // pred_fallthru
      _
    // Predicated region
    $region30: #{tpu_custom_call.1} parent=1 // pred_check
      _
    $region31: #{tpu_custom_call.1} parent=1 // pred_check_branch
      %72 = sbr.rel (0) target = $region33
    $region32: #{tpu_custom_call.1} parent=1 // pred_region
      %74 = dma.done [#allocation4], 448
    $region33: #{tpu_custom_call.1} parent=1 // pred_fallthru
      _
    // Predicated region
    $region34: #{tpu_custom_call.1} parent=1 // pred_check
      _
    $region35: #{tpu_custom_call.1} parent=1 // pred_check_branch
      %76 = sbr.rel (0) target = $region37
    $region36: #{tpu_custom_call.1} parent=1 // pred_region
      %78 = dma.done [#allocation6], 28672
    $region37: #{tpu_custom_call.1} parent=1 // pred_fallthru
      _
    // Predicated region
    $region38: #{tpu_custom_call.1} parent=1 // pred_check
      _
    $region39: #{tpu_custom_call.1} parent=1 // pred_check_branch
      %80 = sbr.rel (0) target = $region41
    $region40: #{tpu_custom_call.1} parent=1 // pred_region
      %82 = dma.done [#allocation6], 64
    $region41: #{tpu_custom_call.1} parent=1 // pred_fallthru
      _
    // Predicated region
    $region42: #{tpu_custom_call.1} parent=1 // pred_check
      _
    $region43: #{tpu_custom_call.1} parent=1 // pred_check_branch
      %84 = sbr.rel (0) target = $region45
    $region44: #{tpu_custom_call.1} parent=1 // pred_region
      %86 = dma.done [#allocation9], 4096
    $region45: #{tpu_custom_call.1} parent=1 // pred_fallthru
      _
    %v87 = vld [vmem:[#allocation3] sm:$0xff]
    %v88 = vld [vmem:[#allocation3 + $0x8] sm:$0xff]
    %v89 = vld [vmem:[#allocation3 + $0x10] sm:$0xff]
    %v90 = vld [vmem:[#allocation3 + $0x18] sm:$0xf]
    %v91 = vld [vmem:[#allocation5] sm:$0xff]
    %v92 = vld [vmem:[#allocation5 + $0x8] sm:$0xff]
    %v93 = vld [vmem:[#allocation5 + $0x10] sm:$0xff]
    %v94 = vld [vmem:[#allocation5 + $0x18] sm:$0xff]
    %v95 = vld [vmem:[#allocation5 + $0x20] sm:$0xff]
    %v96 = vld [vmem:[#allocation5 + $0x28] sm:$0xff]
    %v97 = vld [vmem:[#allocation5 + $0x30] sm:$0xff]
    %v98 = vld [vmem:[#allocation5 + $0x38] sm:$0xff]
    %v99 = vld [vmem:[#allocation5 + $0x40] sm:$0xff]
    %v100 = vld [vmem:[#allocation5 + $0x48] sm:$0xff]
    %v101 = vld [vmem:[#allocation5 + $0x50] sm:$0xff]
    %v102 = vld [vmem:[#allocation5 + $0x58] sm:$0xff]
    %v103 = vld [vmem:[#allocation5 + $0x60] sm:$0xff]
    %v104 = vld [vmem:[#allocation5 + $0x68] sm:$0xff]
    %v105 = vld [vmem:[#allocation5 + $0x70] sm:$0xff]
    %v106 = vld [vmem:[#allocation5 + $0x78] sm:$0xff]
    %v107 = vld [vmem:[#allocation5 + $0x80] sm:$0xff]
    %v108 = vld [vmem:[#allocation5 + $0x88] sm:$0xff]
    %v109 = vld [vmem:[#allocation5 + $0x90] sm:$0xff]
    %v110 = vld [vmem:[#allocation5 + $0x98] sm:$0xff]
    %v111 = vld [vmem:[#allocation5 + $0xa0] sm:$0xff]
    %v112 = vld [vmem:[#allocation5 + $0xa8] sm:$0xff]
    %v113 = vld [vmem:[#allocation5 + $0xb0] sm:$0xff]
    %v114 = vld [vmem:[#allocation5 + $0xb8] sm:$0xff]
    %v115 = vld [vmem:[#allocation5 + $0xc0] sm:$0xff]
    %v116 = vld [vmem:[#allocation5 + $0xc8] sm:$0xff]
    %v117 = vld [vmem:[#allocation5 + $0xd0] sm:$0xff]
    %v118 = vld [vmem:[#allocation5 + $0xd8] sm:$0xff]
    %v119 = vld [vmem:[#allocation5 + $0xe0] sm:$0xff]
    %v120 = vld [vmem:[#allocation5 + $0xe8] sm:$0xff]
    %v121 = vld [vmem:[#allocation5 + $0xf0] sm:$0xff]
    %v122 = vld [vmem:[#allocation5 + $0xf8] sm:$0xff]
    %v123 = vld [vmem:[#allocation5 + $0x100] sm:$0xff]
    %v124 = vld [vmem:[#allocation5 + $0x108] sm:$0xff]
    %v125 = vld [vmem:[#allocation5 + $0x110] sm:$0xff]
    %v126 = vld [vmem:[#allocation5 + $0x118] sm:$0xff]
    %v127 = vld [vmem:[#allocation5 + $0x120] sm:$0xff]
    %v128 = vld [vmem:[#allocation5 + $0x128] sm:$0xff]
    %v129 = vld [vmem:[#allocation5 + $0x130] sm:$0xff]
    %v130 = vld [vmem:[#allocation5 + $0x138] sm:$0xff]
    %v131 = vld [vmem:[#allocation5 + $0x140] sm:$0xff]
    %v132 = vld [vmem:[#allocation5 + $0x148] sm:$0xff]
    %v133 = vld [vmem:[#allocation5 + $0x150] sm:$0xff]
    %v134 = vld [vmem:[#allocation5 + $0x158] sm:$0xff]
    %v135 = vld [vmem:[#allocation5 + $0x160] sm:$0xff]
    %v136 = vld [vmem:[#allocation5 + $0x168] sm:$0xff]
    %v137 = vld [vmem:[#allocation5 + $0x170] sm:$0xff]
    %v138 = vld [vmem:[#allocation5 + $0x178] sm:$0xff]
    %v139 = vld [vmem:[#allocation5 + $0x180] sm:$0xff]
    %v140 = vld [vmem:[#allocation5 + $0x188] sm:$0xff]
    %v141 = vld [vmem:[#allocation5 + $0x190] sm:$0xff]
    %v142 = vld [vmem:[#allocation5 + $0x198] sm:$0xff]
    %v143 = vld [vmem:[#allocation5 + $0x1a0] sm:$0xff]
    %v144 = vld [vmem:[#allocation5 + $0x1a8] sm:$0xff]
    %v145 = vld [vmem:[#allocation5 + $0x1b0] sm:$0xff]
    %v146 = vld [vmem:[#allocation5 + $0x1b8] sm:$0xff]
    %v147 = vld [vmem:[#allocation5 + $0x1c0] sm:$0xff]
    %v148 = vld [vmem:[#allocation5 + $0x1c8] sm:$0xff]
    %v149 = vld [vmem:[#allocation5 + $0x1d0] sm:$0xff]
    %v150 = vld [vmem:[#allocation5 + $0x1d8] sm:$0xff]
    %v151 = vld [vmem:[#allocation5 + $0x1e0] sm:$0xff]
    %v152 = vld [vmem:[#allocation5 + $0x1e8] sm:$0xff]
    %v153 = vld [vmem:[#allocation5 + $0x1f0] sm:$0xff]
    %v154 = vld [vmem:[#allocation5 + $0x1f8] sm:$0xff]
    %v155 = vld [vmem:[#allocation5 + $0x200] sm:$0xff]
    %v156 = vld [vmem:[#allocation5 + $0x208] sm:$0xff]
    %v157 = vld [vmem:[#allocation5 + $0x210] sm:$0xff]
    %v158 = vld [vmem:[#allocation5 + $0x218] sm:$0xff]
    %v159 = vld [vmem:[#allocation5 + $0x220] sm:$0xff]
    %v160 = vld [vmem:[#allocation5 + $0x228] sm:$0xff]
    %v161 = vld [vmem:[#allocation5 + $0x230] sm:$0xff]
    %v162 = vld [vmem:[#allocation5 + $0x238] sm:$0xff]
    %v163 = vld [vmem:[#allocation5 + $0x240] sm:$0xff]
    %v164 = vld [vmem:[#allocation5 + $0x248] sm:$0xff]
    %v165 = vld [vmem:[#allocation5 + $0x250] sm:$0xff]
    %v166 = vld [vmem:[#allocation5 + $0x258] sm:$0xff]
    %v167 = vld [vmem:[#allocation5 + $0x260] sm:$0xff]
    %v168 = vld [vmem:[#allocation5 + $0x268] sm:$0xff]
    %v169 = vld [vmem:[#allocation5 + $0x270] sm:$0xff]
    %v170 = vld [vmem:[#allocation5 + $0x278] sm:$0xff]
    %v171 = vld [vmem:[#allocation5 + $0x280] sm:$0xff]
    %v172 = vld [vmem:[#allocation5 + $0x288] sm:$0xff]
    %v173 = vld [vmem:[#allocation5 + $0x290] sm:$0xff]
    %v174 = vld [vmem:[#allocation5 + $0x298] sm:$0xff]
    %v175 = vld [vmem:[#allocation5 + $0x2a0] sm:$0xff]
    %v176 = vld [vmem:[#allocation5 + $0x2a8] sm:$0xff]
    %v177 = vld [vmem:[#allocation5 + $0x2b0] sm:$0xff]
    %v178 = vld [vmem:[#allocation5 + $0x2b8] sm:$0xff]
    %v179 = vld [vmem:[#allocation5 + $0x2c0] sm:$0xff]
    %v180 = vld [vmem:[#allocation5 + $0x2c8] sm:$0xff]
    %v181 = vld [vmem:[#allocation5 + $0x2d0] sm:$0xff]
    %v182 = vld [vmem:[#allocation5 + $0x2d8] sm:$0xff]
    %v183 = vld [vmem:[#allocation5 + $0x2e0] sm:$0xff]
    %v184 = vld [vmem:[#allocation5 + $0x2e8] sm:$0xff]
    %v185 = vld [vmem:[#allocation5 + $0x2f0] sm:$0xff]
    %v186 = vld [vmem:[#allocation5 + $0x2f8] sm:$0xff]
    %v187 = vld [vmem:[#allocation5 + $0x300] sm:$0xff]
    %v188 = vld [vmem:[#allocation5 + $0x308] sm:$0xff]
    %v189 = vld [vmem:[#allocation5 + $0x310] sm:$0xff]
    %v190 = vld [vmem:[#allocation5 + $0x318] sm:$0xff]
    %v191 = vld [vmem:[#allocation5 + $0x320] sm:$0xff]
    %v192 = vld [vmem:[#allocation5 + $0x328] sm:$0xff]
    %v193 = vld [vmem:[#allocation5 + $0x330] sm:$0xff]
    %v194 = vld [vmem:[#allocation5 + $0x338] sm:$0xff]
    %v195 = vld [vmem:[#allocation5 + $0x340] sm:$0xff]
    %v196 = vld [vmem:[#allocation5 + $0x348] sm:$0xff]
    %v197 = vld [vmem:[#allocation5 + $0x350] sm:$0xff]
    %v198 = vld [vmem:[#allocation5 + $0x358] sm:$0xff]
    %v199 = vld [vmem:[#allocation5 + $0x360] sm:$0xff]
    %v200 = vld [vmem:[#allocation5 + $0x368] sm:$0xff]
    %v201 = vld [vmem:[#allocation5 + $0x370] sm:$0xff]
    %v202 = vld [vmem:[#allocation5 + $0x378] sm:$0xff]
    %v203 = vld [vmem:[#allocation5 + $0x380] sm:$0xff]
    %v204 = vld [vmem:[#allocation5 + $0x388] sm:$0xff]
    %v205 = vld [vmem:[#allocation5 + $0x390] sm:$0xff]
    %v206 = vld [vmem:[#allocation5 + $0x398] sm:$0xff]
    %v207 = vld [vmem:[#allocation5 + $0x3a0] sm:$0xff]
    %v208 = vld [vmem:[#allocation5 + $0x3a8] sm:$0xff]
    %v209 = vld [vmem:[#allocation5 + $0x3b0] sm:$0xff]
    %v210 = vld [vmem:[#allocation5 + $0x3b8] sm:$0xff]
    %v211 = vld [vmem:[#allocation5 + $0x3c0] sm:$0xff]
    %v212 = vld [vmem:[#allocation5 + $0x3c8] sm:$0xff]
    %v213 = vld [vmem:[#allocation5 + $0x3d0] sm:$0xff]
    %v214 = vld [vmem:[#allocation5 + $0x3d8] sm:$0xff]
    %v215 = vld [vmem:[#allocation5 + $0x3e0] sm:$0xff]
    %v216 = vld [vmem:[#allocation5 + $0x3e8] sm:$0xff]
    %v217 = vld [vmem:[#allocation5 + $0x3f0] sm:$0xff]
    %v218 = vld [vmem:[#allocation5 + $0x3f8] sm:$0xff]
    %v219 = vld [vmem:[#allocation5 + $0x400] sm:$0xff]
    %v220 = vld [vmem:[#allocation5 + $0x408] sm:$0xff]
    %v221 = vld [vmem:[#allocation5 + $0x410] sm:$0xff]
    %v222 = vld [vmem:[#allocation5 + $0x418] sm:$0xff]
    %v223 = vld [vmem:[#allocation5 + $0x420] sm:$0xff]
    %v224 = vld [vmem:[#allocation5 + $0x428] sm:$0xff]
    %v225 = vld [vmem:[#allocation5 + $0x430] sm:$0xff]
    %v226 = vld [vmem:[#allocation5 + $0x438] sm:$0xff]
    %v227 = vld [vmem:[#allocation5 + $0x440] sm:$0xff]
    %v228 = vld [vmem:[#allocation5 + $0x448] sm:$0xff]
    %v229 = vld [vmem:[#allocation5 + $0x450] sm:$0xff]
    %v230 = vld [vmem:[#allocation5 + $0x458] sm:$0xff]
    %v231 = vld [vmem:[#allocation5 + $0x460] sm:$0xff]
    %v232 = vld [vmem:[#allocation5 + $0x468] sm:$0xff]
    %v233 = vld [vmem:[#allocation5 + $0x470] sm:$0xff]
    %v234 = vld [vmem:[#allocation5 + $0x478] sm:$0xff]
    %v235 = vld [vmem:[#allocation5 + $0x480] sm:$0xff]
    %v236 = vld [vmem:[#allocation5 + $0x488] sm:$0xff]
    %v237 = vld [vmem:[#allocation5 + $0x490] sm:$0xff]
    %v238 = vld [vmem:[#allocation5 + $0x498] sm:$0xff]
    %v239 = vld [vmem:[#allocation5 + $0x4a0] sm:$0xff]
    %v240 = vld [vmem:[#allocation5 + $0x4a8] sm:$0xff]
    %v241 = vld [vmem:[#allocation5 + $0x4b0] sm:$0xff]
    %v242 = vld [vmem:[#allocation5 + $0x4b8] sm:$0xff]
    %v243 = vld [vmem:[#allocation5 + $0x4c0] sm:$0xff]
    %v244 = vld [vmem:[#allocation5 + $0x4c8] sm:$0xff]
    %v245 = vld [vmem:[#allocation5 + $0x4d0] sm:$0xff]
    %v246 = vld [vmem:[#allocation5 + $0x4d8] sm:$0xff]
    %v247 = vld [vmem:[#allocation5 + $0x4e0] sm:$0xff]
    %v248 = vld [vmem:[#allocation5 + $0x4e8] sm:$0xff]
    %v249 = vld [vmem:[#allocation5 + $0x4f0] sm:$0xff]
    %v250 = vld [vmem:[#allocation5 + $0x4f8] sm:$0xff]
    %v251 = vld [vmem:[#allocation5 + $0x500] sm:$0xff]
    %v252 = vld [vmem:[#allocation5 + $0x508] sm:$0xff]
    %v253 = vld [vmem:[#allocation5 + $0x510] sm:$0xff]
    %v254 = vld [vmem:[#allocation5 + $0x518] sm:$0xff]
    %v255 = vld [vmem:[#allocation5 + $0x520] sm:$0xff]
    %v256 = vld [vmem:[#allocation5 + $0x528] sm:$0xff]
    %v257 = vld [vmem:[#allocation5 + $0x530] sm:$0xff]
    %v258 = vld [vmem:[#allocation5 + $0x538] sm:$0xff]
    %v259 = vld [vmem:[#allocation5 + $0x540] sm:$0xff]
    %v260 = vld [vmem:[#allocation5 + $0x548] sm:$0xff]
    %v261 = vld [vmem:[#allocation5 + $0x550] sm:$0xff]
    %v262 = vld [vmem:[#allocation5 + $0x558] sm:$0xff]
    %v263 = vld [vmem:[#allocation5 + $0x560] sm:$0xff]
    %v264 = vld [vmem:[#allocation5 + $0x568] sm:$0xff]
    %v265 = vld [vmem:[#allocation5 + $0x570] sm:$0xff]
    %v266 = vld [vmem:[#allocation5 + $0x578] sm:$0xff]
    %v267 = vld [vmem:[#allocation5 + $0x580] sm:$0xff]
    %v268 = vld [vmem:[#allocation5 + $0x588] sm:$0xff]
    %v269 = vld [vmem:[#allocation5 + $0x590] sm:$0xff]
    %v270 = vld [vmem:[#allocation5 + $0x598] sm:$0xff]
    %v271 = vld [vmem:[#allocation5 + $0x5a0] sm:$0xff]
    %v272 = vld [vmem:[#allocation5 + $0x5a8] sm:$0xff]
    %v273 = vld [vmem:[#allocation5 + $0x5b0] sm:$0xff]
    %v274 = vld [vmem:[#allocation5 + $0x5b8] sm:$0xff]
    %v275 = vld [vmem:[#allocation5 + $0x5c0] sm:$0xff]
    %v276 = vld [vmem:[#allocation5 + $0x5c8] sm:$0xff]
    %v277 = vld [vmem:[#allocation5 + $0x5d0] sm:$0xff]
    %v278 = vld [vmem:[#allocation5 + $0x5d8] sm:$0xff]
    %v279 = vld [vmem:[#allocation5 + $0x5e0] sm:$0xff]
    %v280 = vld [vmem:[#allocation5 + $0x5e8] sm:$0xff]
    %v281 = vld [vmem:[#allocation5 + $0x5f0] sm:$0xff]
    %v282 = vld [vmem:[#allocation5 + $0x5f8] sm:$0xff]
    %v283 = vld [vmem:[#allocation5 + $0x600] sm:$0xff]
    %v284 = vld [vmem:[#allocation5 + $0x608] sm:$0xff]
    %v285 = vld [vmem:[#allocation5 + $0x610] sm:$0xff]
    %v286 = vld [vmem:[#allocation5 + $0x618] sm:$0xff]
    %v287 = vld [vmem:[#allocation5 + $0x620] sm:$0xff]
    %v288 = vld [vmem:[#allocation5 + $0x628] sm:$0xff]
    %v289 = vld [vmem:[#allocation5 + $0x630] sm:$0xff]
    %v290 = vld [vmem:[#allocation5 + $0x638] sm:$0xff]
    %v291 = vld [vmem:[#allocation5 + $0x640] sm:$0xff]
    %v292 = vld [vmem:[#allocation5 + $0x648] sm:$0xff]
    %v293 = vld [vmem:[#allocation5 + $0x650] sm:$0xff]
    %v294 = vld [vmem:[#allocation5 + $0x658] sm:$0xff]
    %v295 = vld [vmem:[#allocation5 + $0x660] sm:$0xff]
    %v296 = vld [vmem:[#allocation5 + $0x668] sm:$0xff]
    %v297 = vld [vmem:[#allocation5 + $0x670] sm:$0xff]
    %v298 = vld [vmem:[#allocation5 + $0x678] sm:$0xff]
    %v299 = vld [vmem:[#allocation5 + $0x680] sm:$0xff]
    %v300 = vld [vmem:[#allocation5 + $0x688] sm:$0xff]
    %v301 = vld [vmem:[#allocation5 + $0x690] sm:$0xff]
    %v302 = vld [vmem:[#allocation5 + $0x698] sm:$0xff]
    %v303 = vld [vmem:[#allocation5 + $0x6a0] sm:$0xff]
    %v304 = vld [vmem:[#allocation5 + $0x6a8] sm:$0xff]
    %v305 = vld [vmem:[#allocation5 + $0x6b0] sm:$0xff]
    %v306 = vld [vmem:[#allocation5 + $0x6b8] sm:$0xff]
    %v307 = vld [vmem:[#allocation5 + $0x6c0] sm:$0xff]
    %v308 = vld [vmem:[#allocation5 + $0x6c8] sm:$0xff]
    %v309 = vld [vmem:[#allocation5 + $0x6d0] sm:$0xff]
    %v310 = vld [vmem:[#allocation5 + $0x6d8] sm:$0xff]
    %v311 = vld [vmem:[#allocation5 + $0x6e0] sm:$0xff]
    %v312 = vld [vmem:[#allocation5 + $0x6e8] sm:$0xff]
    %v313 = vld [vmem:[#allocation5 + $0x6f0] sm:$0xff]
    %v314 = vld [vmem:[#allocation5 + $0x6f8] sm:$0xff]
    %v315 = vld [vmem:[#allocation7] sm:$0xf]
    %v317 = vperm.slane %v315, 0
    %v318 = vperm.slane %v315, 1
    %v319 = vperm.slane %v315, 2
    %v320 = vperm.slane %v315, 3
    %v329 = vunpack.c.l.b16 %v87
    %v330 = vunpack.c.h.b16 %v87
    %v331 = vunpack.c.l.b16 %v88
    %v332 = vunpack.c.h.b16 %v88
    %v333 = vunpack.c.l.b16 %v89
    %v334 = vunpack.c.h.b16 %v89
    %v335 = vunpack.c.l.b16 %v90
    %v336 = vpack.c.b16 %v329, %v329
    %v337 = vpack.c.b16 %v330, %v330
    %v338 = vpack.c.b16 %v331, %v331
    %v339 = vpack.c.b16 %v332, %v332
    %v340 = vpack.c.b16 %v333, %v333
    %v341 = vpack.c.b16 %v334, %v334
    %v342 = vpack.c.b16 %v335, %v335
    %v574 = vunpack.c.l.b16 %v91
    %v575 = vunpack.c.h.b16 %v91
    %v576 = vunpack.c.l.b16 %v92
    %v577 = vunpack.c.h.b16 %v92
    %v578 = vunpack.c.l.b16 %v93
    %v579 = vunpack.c.h.b16 %v93
    %v580 = vunpack.c.l.b16 %v94
    %v581 = vunpack.c.h.b16 %v94
    %v582 = vunpack.c.l.b16 %v95
    %v583 = vunpack.c.h.b16 %v95
    %v584 = vunpack.c.l.b16 %v96
    %v585 = vunpack.c.h.b16 %v96
    %v586 = vunpack.c.l.b16 %v97
    %v587 = vunpack.c.h.b16 %v97
    %v588 = vunpack.c.l.b16 %v98
    %v589 = vunpack.c.h.b16 %v98
    %v590 = vunpack.c.l.b16 %v99
    %v591 = vunpack.c.h.b16 %v99
    %v592 = vunpack.c.l.b16 %v100
    %v593 = vunpack.c.h.b16 %v100
    %v594 = vunpack.c.l.b16 %v101
    %v595 = vunpack.c.h.b16 %v101
    %v596 = vunpack.c.l.b16 %v102
    %v597 = vunpack.c.h.b16 %v102
    %v598 = vunpack.c.l.b16 %v103
    %v599 = vunpack.c.h.b16 %v103
    %v600 = vunpack.c.l.b16 %v104
    %v601 = vunpack.c.h.b16 %v104
    %v602 = vunpack.c.l.b16 %v105
    %v603 = vunpack.c.h.b16 %v105
    %v604 = vunpack.c.l.b16 %v106
    %v605 = vunpack.c.h.b16 %v106
    %v606 = vunpack.c.l.b16 %v107
    %v607 = vunpack.c.h.b16 %v107
    %v608 = vunpack.c.l.b16 %v108
    %v609 = vunpack.c.h.b16 %v108
    %v610 = vunpack.c.l.b16 %v109
    %v611 = vunpack.c.h.b16 %v109
    %v612 = vunpack.c.l.b16 %v110
    %v613 = vunpack.c.h.b16 %v110
    %v614 = vunpack.c.l.b16 %v111
    %v615 = vunpack.c.h.b16 %v111
    %v616 = vunpack.c.l.b16 %v112
    %v617 = vunpack.c.h.b16 %v112
    %v618 = vunpack.c.l.b16 %v113
    %v619 = vunpack.c.h.b16 %v113
    %v620 = vunpack.c.l.b16 %v114
    %v621 = vunpack.c.h.b16 %v114
    %v622 = vunpack.c.l.b16 %v115
    %v623 = vunpack.c.h.b16 %v115
    %v624 = vunpack.c.l.b16 %v116
    %v625 = vunpack.c.h.b16 %v116
    %v626 = vunpack.c.l.b16 %v117
    %v627 = vunpack.c.h.b16 %v117
    %v628 = vunpack.c.l.b16 %v118
    %v629 = vunpack.c.h.b16 %v118
    %v630 = vunpack.c.l.b16 %v119
    %v631 = vunpack.c.h.b16 %v119
    %v632 = vunpack.c.l.b16 %v120
    %v633 = vunpack.c.h.b16 %v120
    %v634 = vunpack.c.l.b16 %v121
    %v635 = vunpack.c.h.b16 %v121
    %v636 = vunpack.c.l.b16 %v122
    %v637 = vunpack.c.h.b16 %v122
    %v638 = vunpack.c.l.b16 %v123
    %v639 = vunpack.c.h.b16 %v123
    %v640 = vunpack.c.l.b16 %v124
    %v641 = vunpack.c.h.b16 %v124
    %v642 = vunpack.c.l.b16 %v125
    %v643 = vunpack.c.h.b16 %v125
    %v644 = vunpack.c.l.b16 %v126
    %v645 = vunpack.c.h.b16 %v126
    %v646 = vunpack.c.l.b16 %v127
    %v647 = vunpack.c.h.b16 %v127
    %v648 = vunpack.c.l.b16 %v128
    %v649 = vunpack.c.h.b16 %v128
    %v650 = vunpack.c.l.b16 %v129
    %v651 = vunpack.c.h.b16 %v129
    %v652 = vunpack.c.l.b16 %v130
    %v653 = vunpack.c.h.b16 %v130
    %v654 = vunpack.c.l.b16 %v131
    %v655 = vunpack.c.h.b16 %v131
    %v656 = vunpack.c.l.b16 %v132
    %v657 = vunpack.c.h.b16 %v132
    %v658 = vunpack.c.l.b16 %v133
    %v659 = vunpack.c.h.b16 %v133
    %v660 = vunpack.c.l.b16 %v134
    %v661 = vunpack.c.h.b16 %v134
    %v662 = vunpack.c.l.b16 %v135
    %v663 = vunpack.c.h.b16 %v135
    %v664 = vunpack.c.l.b16 %v136
    %v665 = vunpack.c.h.b16 %v136
    %v666 = vunpack.c.l.b16 %v137
    %v667 = vunpack.c.h.b16 %v137
    %v668 = vunpack.c.l.b16 %v138
    %v669 = vunpack.c.h.b16 %v138
    %v670 = vunpack.c.l.b16 %v139
    %v671 = vunpack.c.h.b16 %v139
    %v672 = vunpack.c.l.b16 %v140
    %v673 = vunpack.c.h.b16 %v140
    %v674 = vunpack.c.l.b16 %v141
    %v675 = vunpack.c.h.b16 %v141
    %v676 = vunpack.c.l.b16 %v142
    %v677 = vunpack.c.h.b16 %v142
    %v678 = vunpack.c.l.b16 %v143
    %v679 = vunpack.c.h.b16 %v143
    %v680 = vunpack.c.l.b16 %v144
    %v681 = vunpack.c.h.b16 %v144
    %v682 = vunpack.c.l.b16 %v145
    %v683 = vunpack.c.h.b16 %v145
    %v684 = vunpack.c.l.b16 %v146
    %v685 = vunpack.c.h.b16 %v146
    %v686 = vunpack.c.l.b16 %v147
    %v687 = vunpack.c.h.b16 %v147
    %v688 = vunpack.c.l.b16 %v148
    %v689 = vunpack.c.h.b16 %v148
    %v690 = vunpack.c.l.b16 %v149
    %v691 = vunpack.c.h.b16 %v149
    %v692 = vunpack.c.l.b16 %v150
    %v693 = vunpack.c.h.b16 %v150
    %v694 = vunpack.c.l.b16 %v151
    %v695 = vunpack.c.h.b16 %v151
    %v696 = vunpack.c.l.b16 %v152
    %v697 = vunpack.c.h.b16 %v152
    %v698 = vunpack.c.l.b16 %v153
    %v699 = vunpack.c.h.b16 %v153
    %v700 = vunpack.c.l.b16 %v154
    %v701 = vunpack.c.h.b16 %v154
    %v702 = vunpack.c.l.b16 %v155
    %v703 = vunpack.c.h.b16 %v155
    %v704 = vunpack.c.l.b16 %v156
    %v705 = vunpack.c.h.b16 %v156
    %v706 = vunpack.c.l.b16 %v157
    %v707 = vunpack.c.h.b16 %v157
    %v708 = vunpack.c.l.b16 %v158
    %v709 = vunpack.c.h.b16 %v158
    %v710 = vunpack.c.l.b16 %v159
    %v711 = vunpack.c.h.b16 %v159
    %v712 = vunpack.c.l.b16 %v160
    %v713 = vunpack.c.h.b16 %v160
    %v714 = vunpack.c.l.b16 %v161
    %v715 = vunpack.c.h.b16 %v161
    %v716 = vunpack.c.l.b16 %v162
    %v717 = vunpack.c.h.b16 %v162
    %v718 = vunpack.c.l.b16 %v163
    %v719 = vunpack.c.h.b16 %v163
    %v720 = vunpack.c.l.b16 %v164
    %v721 = vunpack.c.h.b16 %v164
    %v722 = vunpack.c.l.b16 %v165
    %v723 = vunpack.c.h.b16 %v165
    %v724 = vunpack.c.l.b16 %v166
    %v725 = vunpack.c.h.b16 %v166
    %v726 = vunpack.c.l.b16 %v167
    %v727 = vunpack.c.h.b16 %v167
    %v728 = vunpack.c.l.b16 %v168
    %v729 = vunpack.c.h.b16 %v168
    %v730 = vunpack.c.l.b16 %v169
    %v731 = vunpack.c.h.b16 %v169
    %v732 = vunpack.c.l.b16 %v170
    %v733 = vunpack.c.h.b16 %v170
    %v734 = vunpack.c.l.b16 %v171
    %v735 = vunpack.c.h.b16 %v171
    %v736 = vunpack.c.l.b16 %v172
    %v737 = vunpack.c.h.b16 %v172
    %v738 = vunpack.c.l.b16 %v173
    %v739 = vunpack.c.h.b16 %v173
    %v740 = vunpack.c.l.b16 %v174
    %v741 = vunpack.c.h.b16 %v174
    %v742 = vunpack.c.l.b16 %v175
    %v743 = vunpack.c.h.b16 %v175
    %v744 = vunpack.c.l.b16 %v176
    %v745 = vunpack.c.h.b16 %v176
    %v746 = vunpack.c.l.b16 %v177
    %v747 = vunpack.c.h.b16 %v177
    %v748 = vunpack.c.l.b16 %v178
    %v749 = vunpack.c.h.b16 %v178
    %v750 = vunpack.c.l.b16 %v179
    %v751 = vunpack.c.h.b16 %v179
    %v752 = vunpack.c.l.b16 %v180
    %v753 = vunpack.c.h.b16 %v180
    %v754 = vunpack.c.l.b16 %v181
    %v755 = vunpack.c.h.b16 %v181
    %v756 = vunpack.c.l.b16 %v182
    %v757 = vunpack.c.h.b16 %v182
    %v758 = vunpack.c.l.b16 %v183
    %v759 = vunpack.c.h.b16 %v183
    %v760 = vunpack.c.l.b16 %v184
    %v761 = vunpack.c.h.b16 %v184
    %v762 = vunpack.c.l.b16 %v185
    %v763 = vunpack.c.h.b16 %v185
    %v764 = vunpack.c.l.b16 %v186
    %v765 = vunpack.c.h.b16 %v186
    %v766 = vunpack.c.l.b16 %v187
    %v767 = vunpack.c.h.b16 %v187
    %v768 = vunpack.c.l.b16 %v188
    %v769 = vunpack.c.h.b16 %v188
    %v770 = vunpack.c.l.b16 %v189
    %v771 = vunpack.c.h.b16 %v189
    %v772 = vunpack.c.l.b16 %v190
    %v773 = vunpack.c.h.b16 %v190
    %v774 = vunpack.c.l.b16 %v191
    %v775 = vunpack.c.h.b16 %v191
    %v776 = vunpack.c.l.b16 %v192
    %v777 = vunpack.c.h.b16 %v192
    %v778 = vunpack.c.l.b16 %v193
    %v779 = vunpack.c.h.b16 %v193
    %v780 = vunpack.c.l.b16 %v194
    %v781 = vunpack.c.h.b16 %v194
    %v782 = vunpack.c.l.b16 %v195
    %v783 = vunpack.c.h.b16 %v195
    %v784 = vunpack.c.l.b16 %v196
    %v785 = vunpack.c.h.b16 %v196
    %v786 = vunpack.c.l.b16 %v197
    %v787 = vunpack.c.h.b16 %v197
    %v788 = vunpack.c.l.b16 %v198
    %v789 = vunpack.c.h.b16 %v198
    %v790 = vunpack.c.l.b16 %v199
    %v791 = vunpack.c.h.b16 %v199
    %v792 = vunpack.c.l.b16 %v200
    %v793 = vunpack.c.h.b16 %v200
    %v794 = vunpack.c.l.b16 %v201
    %v795 = vunpack.c.h.b16 %v201
    %v796 = vunpack.c.l.b16 %v202
    %v797 = vunpack.c.h.b16 %v202
    %v798 = vunpack.c.l.b16 %v203
    %v799 = vunpack.c.h.b16 %v203
    %v800 = vunpack.c.l.b16 %v204
    %v801 = vunpack.c.h.b16 %v204
    %v802 = vunpack.c.l.b16 %v205
    %v803 = vunpack.c.h.b16 %v205
    %v804 = vunpack.c.l.b16 %v206
    %v805 = vunpack.c.h.b16 %v206
    %v806 = vunpack.c.l.b16 %v207
    %v807 = vunpack.c.h.b16 %v207
    %v808 = vunpack.c.l.b16 %v208
    %v809 = vunpack.c.h.b16 %v208
    %v810 = vunpack.c.l.b16 %v209
    %v811 = vunpack.c.h.b16 %v209
    %v812 = vunpack.c.l.b16 %v210
    %v813 = vunpack.c.h.b16 %v210
    %v814 = vunpack.c.l.b16 %v211
    %v815 = vunpack.c.h.b16 %v211
    %v816 = vunpack.c.l.b16 %v212
    %v817 = vunpack.c.h.b16 %v212
    %v818 = vunpack.c.l.b16 %v213
    %v819 = vunpack.c.h.b16 %v213
    %v820 = vunpack.c.l.b16 %v214
    %v821 = vunpack.c.h.b16 %v214
    %v822 = vunpack.c.l.b16 %v215
    %v823 = vunpack.c.h.b16 %v215
    %v824 = vunpack.c.l.b16 %v216
    %v825 = vunpack.c.h.b16 %v216
    %v826 = vunpack.c.l.b16 %v217
    %v827 = vunpack.c.h.b16 %v217
    %v828 = vunpack.c.l.b16 %v218
    %v829 = vunpack.c.h.b16 %v218
    %v830 = vunpack.c.l.b16 %v219
    %v831 = vunpack.c.h.b16 %v219
    %v832 = vunpack.c.l.b16 %v220
    %v833 = vunpack.c.h.b16 %v220
    %v834 = vunpack.c.l.b16 %v221
    %v835 = vunpack.c.h.b16 %v221
    %v836 = vunpack.c.l.b16 %v222
    %v837 = vunpack.c.h.b16 %v222
    %v838 = vunpack.c.l.b16 %v223
    %v839 = vunpack.c.h.b16 %v223
    %v840 = vunpack.c.l.b16 %v224
    %v841 = vunpack.c.h.b16 %v224
    %v842 = vunpack.c.l.b16 %v225
    %v843 = vunpack.c.h.b16 %v225
    %v844 = vunpack.c.l.b16 %v226
    %v845 = vunpack.c.h.b16 %v226
    %v846 = vunpack.c.l.b16 %v227
    %v847 = vunpack.c.h.b16 %v227
    %v848 = vunpack.c.l.b16 %v228
    %v849 = vunpack.c.h.b16 %v228
    %v850 = vunpack.c.l.b16 %v229
    %v851 = vunpack.c.h.b16 %v229
    %v852 = vunpack.c.l.b16 %v230
    %v853 = vunpack.c.h.b16 %v230
    %v854 = vunpack.c.l.b16 %v231
    %v855 = vunpack.c.h.b16 %v231
    %v856 = vunpack.c.l.b16 %v232
    %v857 = vunpack.c.h.b16 %v232
    %v858 = vunpack.c.l.b16 %v233
    %v859 = vunpack.c.h.b16 %v233
    %v860 = vunpack.c.l.b16 %v234
    %v861 = vunpack.c.h.b16 %v234
    %v862 = vunpack.c.l.b16 %v235
    %v863 = vunpack.c.h.b16 %v235
    %v864 = vunpack.c.l.b16 %v236
    %v865 = vunpack.c.h.b16 %v236
    %v866 = vunpack.c.l.b16 %v237
    %v867 = vunpack.c.h.b16 %v237
    %v868 = vunpack.c.l.b16 %v238
    %v869 = vunpack.c.h.b16 %v238
    %v870 = vunpack.c.l.b16 %v239
    %v871 = vunpack.c.h.b16 %v239
    %v872 = vunpack.c.l.b16 %v240
    %v873 = vunpack.c.h.b16 %v240
    %v874 = vunpack.c.l.b16 %v241
    %v875 = vunpack.c.h.b16 %v241
    %v876 = vunpack.c.l.b16 %v242
    %v877 = vunpack.c.h.b16 %v242
    %v878 = vunpack.c.l.b16 %v243
    %v879 = vunpack.c.h.b16 %v243
    %v880 = vunpack.c.l.b16 %v244
    %v881 = vunpack.c.h.b16 %v244
    %v882 = vunpack.c.l.b16 %v245
    %v883 = vunpack.c.h.b16 %v245
    %v884 = vunpack.c.l.b16 %v246
    %v885 = vunpack.c.h.b16 %v246
    %v886 = vunpack.c.l.b16 %v247
    %v887 = vunpack.c.h.b16 %v247
    %v888 = vunpack.c.l.b16 %v248
    %v889 = vunpack.c.h.b16 %v248
    %v890 = vunpack.c.l.b16 %v249
    %v891 = vunpack.c.h.b16 %v249
    %v892 = vunpack.c.l.b16 %v250
    %v893 = vunpack.c.h.b16 %v250
    %v894 = vunpack.c.l.b16 %v251
    %v895 = vunpack.c.h.b16 %v251
    %v896 = vunpack.c.l.b16 %v252
    %v897 = vunpack.c.h.b16 %v252
    %v898 = vunpack.c.l.b16 %v253
    %v899 = vunpack.c.h.b16 %v253
    %v900 = vunpack.c.l.b16 %v254
    %v901 = vunpack.c.h.b16 %v254
    %v902 = vunpack.c.l.b16 %v255
    %v903 = vunpack.c.h.b16 %v255
    %v904 = vunpack.c.l.b16 %v256
    %v905 = vunpack.c.h.b16 %v256
    %v906 = vunpack.c.l.b16 %v257
    %v907 = vunpack.c.h.b16 %v257
    %v908 = vunpack.c.l.b16 %v258
    %v909 = vunpack.c.h.b16 %v258
    %v910 = vunpack.c.l.b16 %v259
    %v911 = vunpack.c.h.b16 %v259
    %v912 = vunpack.c.l.b16 %v260
    %v913 = vunpack.c.h.b16 %v260
    %v914 = vunpack.c.l.b16 %v261
    %v915 = vunpack.c.h.b16 %v261
    %v916 = vunpack.c.l.b16 %v262
    %v917 = vunpack.c.h.b16 %v262
    %v918 = vunpack.c.l.b16 %v263
    %v919 = vunpack.c.h.b16 %v263
    %v920 = vunpack.c.l.b16 %v264
    %v921 = vunpack.c.h.b16 %v264
    %v922 = vunpack.c.l.b16 %v265
    %v923 = vunpack.c.h.b16 %v265
    %v924 = vunpack.c.l.b16 %v266
    %v925 = vunpack.c.h.b16 %v266
    %v926 = vunpack.c.l.b16 %v267
    %v927 = vunpack.c.h.b16 %v267
    %v928 = vunpack.c.l.b16 %v268
    %v929 = vunpack.c.h.b16 %v268
    %v930 = vunpack.c.l.b16 %v269
    %v931 = vunpack.c.h.b16 %v269
    %v932 = vunpack.c.l.b16 %v270
    %v933 = vunpack.c.h.b16 %v270
    %v934 = vunpack.c.l.b16 %v271
    %v935 = vunpack.c.h.b16 %v271
    %v936 = vunpack.c.l.b16 %v272
    %v937 = vunpack.c.h.b16 %v272
    %v938 = vunpack.c.l.b16 %v273
    %v939 = vunpack.c.h.b16 %v273
    %v940 = vunpack.c.l.b16 %v274
    %v941 = vunpack.c.h.b16 %v274
    %v942 = vunpack.c.l.b16 %v275
    %v943 = vunpack.c.h.b16 %v275
    %v944 = vunpack.c.l.b16 %v276
    %v945 = vunpack.c.h.b16 %v276
    %v946 = vunpack.c.l.b16 %v277
    %v947 = vunpack.c.h.b16 %v277
    %v948 = vunpack.c.l.b16 %v278
    %v949 = vunpack.c.h.b16 %v278
    %v950 = vunpack.c.l.b16 %v279
    %v951 = vunpack.c.h.b16 %v279
    %v952 = vunpack.c.l.b16 %v280
    %v953 = vunpack.c.h.b16 %v280
    %v954 = vunpack.c.l.b16 %v281
    %v955 = vunpack.c.h.b16 %v281
    %v956 = vunpack.c.l.b16 %v282
    %v957 = vunpack.c.h.b16 %v282
    %v958 = vunpack.c.l.b16 %v283
    %v959 = vunpack.c.h.b16 %v283
    %v960 = vunpack.c.l.b16 %v284
    %v961 = vunpack.c.h.b16 %v284
    %v962 = vunpack.c.l.b16 %v285
    %v963 = vunpack.c.h.b16 %v285
    %v964 = vunpack.c.l.b16 %v286
    %v965 = vunpack.c.h.b16 %v286
    %v966 = vunpack.c.l.b16 %v287
    %v967 = vunpack.c.h.b16 %v287
    %v968 = vunpack.c.l.b16 %v288
    %v969 = vunpack.c.h.b16 %v288
    %v970 = vunpack.c.l.b16 %v289
    %v971 = vunpack.c.h.b16 %v289
    %v972 = vunpack.c.l.b16 %v290
    %v973 = vunpack.c.h.b16 %v290
    %v974 = vunpack.c.l.b16 %v291
    %v975 = vunpack.c.h.b16 %v291
    %v976 = vunpack.c.l.b16 %v292
    %v977 = vunpack.c.h.b16 %v292
    %v978 = vunpack.c.l.b16 %v293
    %v979 = vunpack.c.h.b16 %v293
    %v980 = vunpack.c.l.b16 %v294
    %v981 = vunpack.c.h.b16 %v294
    %v982 = vunpack.c.l.b16 %v295
    %v983 = vunpack.c.h.b16 %v295
    %v984 = vunpack.c.l.b16 %v296
    %v985 = vunpack.c.h.b16 %v296
    %v986 = vunpack.c.l.b16 %v297
    %v987 = vunpack.c.h.b16 %v297
    %v988 = vunpack.c.l.b16 %v298
    %v989 = vunpack.c.h.b16 %v298
    %v990 = vunpack.c.l.b16 %v299
    %v991 = vunpack.c.h.b16 %v299
    %v992 = vunpack.c.l.b16 %v300
    %v993 = vunpack.c.h.b16 %v300
    %v994 = vunpack.c.l.b16 %v301
    %v995 = vunpack.c.h.b16 %v301
    %v996 = vunpack.c.l.b16 %v302
    %v997 = vunpack.c.h.b16 %v302
    %v998 = vunpack.c.l.b16 %v303
    %v999 = vunpack.c.h.b16 %v303
    %v1000 = vunpack.c.l.b16 %v304
    %v1001 = vunpack.c.h.b16 %v304
    %v1002 = vunpack.c.l.b16 %v305
    %v1003 = vunpack.c.h.b16 %v305
    %v1004 = vunpack.c.l.b16 %v306
    %v1005 = vunpack.c.h.b16 %v306
    %v1006 = vunpack.c.l.b16 %v307
    %v1007 = vunpack.c.h.b16 %v307
    %v1008 = vunpack.c.l.b16 %v308
    %v1009 = vunpack.c.h.b16 %v308
    %v1010 = vunpack.c.l.b16 %v309
    %v1011 = vunpack.c.h.b16 %v309
    %v1012 = vunpack.c.l.b16 %v310
    %v1013 = vunpack.c.h.b16 %v310
    %v1014 = vunpack.c.l.b16 %v311
    %v1015 = vunpack.c.h.b16 %v311
    %v1016 = vunpack.c.l.b16 %v312
    %v1017 = vunpack.c.h.b16 %v312
    %v1018 = vunpack.c.l.b16 %v313
    %v1019 = vunpack.c.h.b16 %v313
    %v1020 = vunpack.c.l.b16 %v314
    %v1021 = vunpack.c.h.b16 %v314
    %v1022 = vpack.c.b16 %v578, %v574
    %v1023 = vpack.c.b16 %v579, %v575
    %v1024 = vpack.c.b16 %v580, %v576
    %v1025 = vpack.c.b16 %v581, %v577
    %v1026 = vpack.c.b16 %v586, %v582
    %v1027 = vpack.c.b16 %v587, %v583
    %v1028 = vpack.c.b16 %v588, %v584
    %v1029 = vpack.c.b16 %v589, %v585
    %v1030 = vpack.c.b16 %v594, %v590
    %v1031 = vpack.c.b16 %v595, %v591
    %v1032 = vpack.c.b16 %v596, %v592
    %v1033 = vpack.c.b16 %v597, %v593
    %v1034 = vpack.c.b16 %v602, %v598
    %v1035 = vpack.c.b16 %v603, %v599
    %v1036 = vpack.c.b16 %v604, %v600
    %v1037 = vpack.c.b16 %v605, %v601
    %v1038 = vpack.c.b16 %v610, %v606
    %v1039 = vpack.c.b16 %v611, %v607
    %v1040 = vpack.c.b16 %v612, %v608
    %v1041 = vpack.c.b16 %v613, %v609
    %v1042 = vpack.c.b16 %v618, %v614
    %v1043 = vpack.c.b16 %v619, %v615
    %v1044 = vpack.c.b16 %v620, %v616
    %v1045 = vpack.c.b16 %v621, %v617
    %v1046 = vpack.c.b16 %v626, %v622
    %v1047 = vpack.c.b16 %v627, %v623
    %v1048 = vpack.c.b16 %v628, %v624
    %v1049 = vpack.c.b16 %v629, %v625
    %v1050 = vpack.c.b16 %v634, %v630
    %v1051 = vpack.c.b16 %v635, %v631
    %v1052 = vpack.c.b16 %v636, %v632
    %v1053 = vpack.c.b16 %v637, %v633
    %v1054 = vpack.c.b16 %v642, %v638
    %v1055 = vpack.c.b16 %v643, %v639
    %v1056 = vpack.c.b16 %v644, %v640
    %v1057 = vpack.c.b16 %v645, %v641
    %v1058 = vpack.c.b16 %v650, %v646
    %v1059 = vpack.c.b16 %v651, %v647
    %v1060 = vpack.c.b16 %v652, %v648
    %v1061 = vpack.c.b16 %v653, %v649
    %v1062 = vpack.c.b16 %v658, %v654
    %v1063 = vpack.c.b16 %v659, %v655
    %v1064 = vpack.c.b16 %v660, %v656
    %v1065 = vpack.c.b16 %v661, %v657
    %v1066 = vpack.c.b16 %v666, %v662
    %v1067 = vpack.c.b16 %v667, %v663
    %v1068 = vpack.c.b16 %v668, %v664
    %v1069 = vpack.c.b16 %v669, %v665
    %v1070 = vpack.c.b16 %v674, %v670
    %v1071 = vpack.c.b16 %v675, %v671
    %v1072 = vpack.c.b16 %v676, %v672
    %v1073 = vpack.c.b16 %v677, %v673
    %v1074 = vpack.c.b16 %v682, %v678
    %v1075 = vpack.c.b16 %v683, %v679
    %v1076 = vpack.c.b16 %v684, %v680
    %v1077 = vpack.c.b16 %v685, %v681
    %v1078 = vpack.c.b16 %v690, %v686
    %v1079 = vpack.c.b16 %v691, %v687
    %v1080 = vpack.c.b16 %v692, %v688
    %v1081 = vpack.c.b16 %v693, %v689
    %v1082 = vpack.c.b16 %v698, %v694
    %v1083 = vpack.c.b16 %v699, %v695
    %v1084 = vpack.c.b16 %v700, %v696
    %v1085 = vpack.c.b16 %v701, %v697
    %v1086 = vpack.c.b16 %v706, %v702
    %v1087 = vpack.c.b16 %v707, %v703
    %v1088 = vpack.c.b16 %v708, %v704
    %v1089 = vpack.c.b16 %v709, %v705
    %v1090 = vpack.c.b16 %v714, %v710
    %v1091 = vpack.c.b16 %v715, %v711
    %v1092 = vpack.c.b16 %v716, %v712
    %v1093 = vpack.c.b16 %v717, %v713
    %v1094 = vpack.c.b16 %v722, %v718
    %v1095 = vpack.c.b16 %v723, %v719
    %v1096 = vpack.c.b16 %v724, %v720
    %v1097 = vpack.c.b16 %v725, %v721
    %v1098 = vpack.c.b16 %v730, %v726
    %v1099 = vpack.c.b16 %v731, %v727
    %v1100 = vpack.c.b16 %v732, %v728
    %v1101 = vpack.c.b16 %v733, %v729
    %v1102 = vpack.c.b16 %v738, %v734
    %v1103 = vpack.c.b16 %v739, %v735
    %v1104 = vpack.c.b16 %v740, %v736
    %v1105 = vpack.c.b16 %v741, %v737
    %v1106 = vpack.c.b16 %v746, %v742
    %v1107 = vpack.c.b16 %v747, %v743
    %v1108 = vpack.c.b16 %v748, %v744
    %v1109 = vpack.c.b16 %v749, %v745
    %v1110 = vpack.c.b16 %v754, %v750
    %v1111 = vpack.c.b16 %v755, %v751
    %v1112 = vpack.c.b16 %v756, %v752
    %v1113 = vpack.c.b16 %v757, %v753
    %v1114 = vpack.c.b16 %v762, %v758
    %v1115 = vpack.c.b16 %v763, %v759
    %v1116 = vpack.c.b16 %v764, %v760
    %v1117 = vpack.c.b16 %v765, %v761
    %v1118 = vpack.c.b16 %v770, %v766
    %v1119 = vpack.c.b16 %v771, %v767
    %v1120 = vpack.c.b16 %v772, %v768
    %v1121 = vpack.c.b16 %v773, %v769
    %v1122 = vpack.c.b16 %v778, %v774
    %v1123 = vpack.c.b16 %v779, %v775
    %v1124 = vpack.c.b16 %v780, %v776
    %v1125 = vpack.c.b16 %v781, %v777
    %v1126 = vpack.c.b16 %v786, %v782
    %v1127 = vpack.c.b16 %v787, %v783
    %v1128 = vpack.c.b16 %v788, %v784
    %v1129 = vpack.c.b16 %v789, %v785
    %v1130 = vpack.c.b16 %v794, %v790
    %v1131 = vpack.c.b16 %v795, %v791
    %v1132 = vpack.c.b16 %v796, %v792
    %v1133 = vpack.c.b16 %v797, %v793
    %v1134 = vpack.c.b16 %v802, %v798
    %v1135 = vpack.c.b16 %v803, %v799
    %v1136 = vpack.c.b16 %v804, %v800
    %v1137 = vpack.c.b16 %v805, %v801
    %v1138 = vpack.c.b16 %v810, %v806
    %v1139 = vpack.c.b16 %v811, %v807
    %v1140 = vpack.c.b16 %v812, %v808
    %v1141 = vpack.c.b16 %v813, %v809
    %v1142 = vpack.c.b16 %v818, %v814
    %v1143 = vpack.c.b16 %v819, %v815
    %v1144 = vpack.c.b16 %v820, %v816
    %v1145 = vpack.c.b16 %v821, %v817
    %v1146 = vpack.c.b16 %v826, %v822
    %v1147 = vpack.c.b16 %v827, %v823
    %v1148 = vpack.c.b16 %v828, %v824
    %v1149 = vpack.c.b16 %v829, %v825
    %v1150 = vpack.c.b16 %v834, %v830
    %v1151 = vpack.c.b16 %v835, %v831
    %v1152 = vpack.c.b16 %v836, %v832
    %v1153 = vpack.c.b16 %v837, %v833
    %v1154 = vpack.c.b16 %v842, %v838
    %v1155 = vpack.c.b16 %v843, %v839
    %v1156 = vpack.c.b16 %v844, %v840
    %v1157 = vpack.c.b16 %v845, %v841
    %v1158 = vpack.c.b16 %v850, %v846
    %v1159 = vpack.c.b16 %v851, %v847
    %v1160 = vpack.c.b16 %v852, %v848
    %v1161 = vpack.c.b16 %v853, %v849
    %v1162 = vpack.c.b16 %v858, %v854
    %v1163 = vpack.c.b16 %v859, %v855
    %v1164 = vpack.c.b16 %v860, %v856
    %v1165 = vpack.c.b16 %v861, %v857
    %v1166 = vpack.c.b16 %v866, %v862
    %v1167 = vpack.c.b16 %v867, %v863
    %v1168 = vpack.c.b16 %v868, %v864
    %v1169 = vpack.c.b16 %v869, %v865
    %v1170 = vpack.c.b16 %v874, %v870
    %v1171 = vpack.c.b16 %v875, %v871
    %v1172 = vpack.c.b16 %v876, %v872
    %v1173 = vpack.c.b16 %v877, %v873
    %v1174 = vpack.c.b16 %v882, %v878
    %v1175 = vpack.c.b16 %v883, %v879
    %v1176 = vpack.c.b16 %v884, %v880
    %v1177 = vpack.c.b16 %v885, %v881
    %v1178 = vpack.c.b16 %v890, %v886
    %v1179 = vpack.c.b16 %v891, %v887
    %v1180 = vpack.c.b16 %v892, %v888
    %v1181 = vpack.c.b16 %v893, %v889
    %v1182 = vpack.c.b16 %v898, %v894
    %v1183 = vpack.c.b16 %v899, %v895
    %v1184 = vpack.c.b16 %v900, %v896
    %v1185 = vpack.c.b16 %v901, %v897
    %v1186 = vpack.c.b16 %v906, %v902
    %v1187 = vpack.c.b16 %v907, %v903
    %v1188 = vpack.c.b16 %v908, %v904
    %v1189 = vpack.c.b16 %v909, %v905
    %v1190 = vpack.c.b16 %v914, %v910
    %v1191 = vpack.c.b16 %v915, %v911
    %v1192 = vpack.c.b16 %v916, %v912
    %v1193 = vpack.c.b16 %v917, %v913
    %v1194 = vpack.c.b16 %v922, %v918
    %v1195 = vpack.c.b16 %v923, %v919
    %v1196 = vpack.c.b16 %v924, %v920
    %v1197 = vpack.c.b16 %v925, %v921
    %v1198 = vpack.c.b16 %v930, %v926
    %v1199 = vpack.c.b16 %v931, %v927
    %v1200 = vpack.c.b16 %v932, %v928
    %v1201 = vpack.c.b16 %v933, %v929
    %v1202 = vpack.c.b16 %v938, %v934
    %v1203 = vpack.c.b16 %v939, %v935
    %v1204 = vpack.c.b16 %v940, %v936
    %v1205 = vpack.c.b16 %v941, %v937
    %v1206 = vpack.c.b16 %v946, %v942
    %v1207 = vpack.c.b16 %v947, %v943
    %v1208 = vpack.c.b16 %v948, %v944
    %v1209 = vpack.c.b16 %v949, %v945
    %v1210 = vpack.c.b16 %v954, %v950
    %v1211 = vpack.c.b16 %v955, %v951
    %v1212 = vpack.c.b16 %v956, %v952
    %v1213 = vpack.c.b16 %v957, %v953
    %v1214 = vpack.c.b16 %v962, %v958
    %v1215 = vpack.c.b16 %v963, %v959
    %v1216 = vpack.c.b16 %v964, %v960
    %v1217 = vpack.c.b16 %v965, %v961
    %v1218 = vpack.c.b16 %v970, %v966
    %v1219 = vpack.c.b16 %v971, %v967
    %v1220 = vpack.c.b16 %v972, %v968
    %v1221 = vpack.c.b16 %v973, %v969
    %v1222 = vpack.c.b16 %v978, %v974
    %v1223 = vpack.c.b16 %v979, %v975
    %v1224 = vpack.c.b16 %v980, %v976
    %v1225 = vpack.c.b16 %v981, %v977
    %v1226 = vpack.c.b16 %v986, %v982
    %v1227 = vpack.c.b16 %v987, %v983
    %v1228 = vpack.c.b16 %v988, %v984
    %v1229 = vpack.c.b16 %v989, %v985
    %v1230 = vpack.c.b16 %v994, %v990
    %v1231 = vpack.c.b16 %v995, %v991
    %v1232 = vpack.c.b16 %v996, %v992
    %v1233 = vpack.c.b16 %v997, %v993
    %v1234 = vpack.c.b16 %v1002, %v998
    %v1235 = vpack.c.b16 %v1003, %v999
    %v1236 = vpack.c.b16 %v1004, %v1000
    %v1237 = vpack.c.b16 %v1005, %v1001
    %v1238 = vpack.c.b16 %v1010, %v1006
    %v1239 = vpack.c.b16 %v1011, %v1007
    %v1240 = vpack.c.b16 %v1012, %v1008
    %v1241 = vpack.c.b16 %v1013, %v1009
    %v1242 = vpack.c.b16 %v1018, %v1014
    %v1243 = vpack.c.b16 %v1019, %v1015
    %v1244 = vpack.c.b16 %v1020, %v1016
    %v1245 = vpack.c.b16 %v1021, %v1017
    %1470 = vmatpush.bf16.msra.mxu0 %v1050
    %1471 = vmatpush.bf16.msra.mxu0 %v1046
    %1472 = vmatpush.bf16.msra.mxu0 %v1042
    %1473 = vmatpush.bf16.msra.mxu0 %v1038
    %1474 = vmatpush.bf16.msra.mxu0 %v1034
    %1475 = vmatpush.bf16.msra.mxu0 %v1030
    %1476 = vmatpush.bf16.msra.mxu0 %v1026
    %1477 = vmatpush.bf16.msra.mxu0 %v1022
    %1478 = vmatmul.bf16.gmra.mxu0 %v336
    %v1479 = vpop.f32.mrf.mxu0
    %v1480 = vadd.f32 %v317, %v1479
    %v1481 = vpop.f32.mrf.mxu0
    %1482 = vdwg.mxu0
    %1483 = vmatpush.bf16.msra.mxu0 %v1082
    %1484 = vmatpush.bf16.msra.mxu0 %v1078
    %1485 = vmatpush.bf16.msra.mxu0 %v1074
    %1486 = vmatpush.bf16.msra.mxu0 %v1070
    %1487 = vmatpush.bf16.msra.mxu0 %v1066
    %1488 = vmatpush.bf16.msra.mxu0 %v1062
    %1489 = vmatpush.bf16.msra.mxu0 %v1058
    %1490 = vmatpush.bf16.msra.mxu0 %v1054
    %1491 = vmatmul.bf16.gmra.mxu0 %v337
    %v1492 = vpop.f32.mrf.mxu0
    %v1493 = vadd.f32 %v1480, %v1492
    %v1494 = vpop.f32.mrf.mxu0
    %1495 = vdwg.mxu0
    %1496 = vmatpush.bf16.msra.mxu0 %v1114
    %1497 = vmatpush.bf16.msra.mxu0 %v1110
    %1498 = vmatpush.bf16.msra.mxu0 %v1106
    %1499 = vmatpush.bf16.msra.mxu0 %v1102
    %1500 = vmatpush.bf16.msra.mxu0 %v1098
    %1501 = vmatpush.bf16.msra.mxu0 %v1094
    %1502 = vmatpush.bf16.msra.mxu0 %v1090
    %1503 = vmatpush.bf16.msra.mxu0 %v1086
    %1504 = vmatmul.bf16.gmra.mxu0 %v338
    %v1505 = vpop.f32.mrf.mxu0
    %v1506 = vadd.f32 %v1493, %v1505
    %v1507 = vpop.f32.mrf.mxu0
    %1508 = vdwg.mxu0
    %1509 = vmatpush.bf16.msra.mxu0 %v1146
    %1510 = vmatpush.bf16.msra.mxu0 %v1142
    %1511 = vmatpush.bf16.msra.mxu0 %v1138
    %1512 = vmatpush.bf16.msra.mxu0 %v1134
    %1513 = vmatpush.bf16.msra.mxu0 %v1130
    %1514 = vmatpush.bf16.msra.mxu0 %v1126
    %1515 = vmatpush.bf16.msra.mxu0 %v1122
    %1516 = vmatpush.bf16.msra.mxu0 %v1118
    %1517 = vmatmul.bf16.gmra.mxu0 %v339
    %v1518 = vpop.f32.mrf.mxu0
    %v1519 = vadd.f32 %v1506, %v1518
    %v1520 = vpop.f32.mrf.mxu0
    %1521 = vdwg.mxu0
    %1522 = vmatpush.bf16.msra.mxu0 %v1178
    %1523 = vmatpush.bf16.msra.mxu0 %v1174
    %1524 = vmatpush.bf16.msra.mxu0 %v1170
    %1525 = vmatpush.bf16.msra.mxu0 %v1166
    %1526 = vmatpush.bf16.msra.mxu0 %v1162
    %1527 = vmatpush.bf16.msra.mxu0 %v1158
    %1528 = vmatpush.bf16.msra.mxu0 %v1154
    %1529 = vmatpush.bf16.msra.mxu0 %v1150
    %1530 = vmatmul.bf16.gmra.mxu0 %v340
    %v1531 = vpop.f32.mrf.mxu0
    %v1532 = vadd.f32 %v1519, %v1531
    %v1533 = vpop.f32.mrf.mxu0
    %1534 = vdwg.mxu0
    %1535 = vmatpush.bf16.msra.mxu0 %v1210
    %1536 = vmatpush.bf16.msra.mxu0 %v1206
    %1537 = vmatpush.bf16.msra.mxu0 %v1202
    %1538 = vmatpush.bf16.msra.mxu0 %v1198
    %1539 = vmatpush.bf16.msra.mxu0 %v1194
    %1540 = vmatpush.bf16.msra.mxu0 %v1190
    %1541 = vmatpush.bf16.msra.mxu0 %v1186
    %1542 = vmatpush.bf16.msra.mxu0 %v1182
    %1543 = vmatmul.bf16.gmra.mxu0 %v341
    %v1544 = vpop.f32.mrf.mxu0
    %v1545 = vadd.f32 %v1532, %v1544
    %v1546 = vpop.f32.mrf.mxu0
    %1547 = vdwg.mxu0
    %1548 = vmatpush.bf16.msra.mxu0 %v1242
    %1549 = vmatpush.bf16.msra.mxu0 %v1238
    %1550 = vmatpush.bf16.msra.mxu0 %v1234
    %1551 = vmatpush.bf16.msra.mxu0 %v1230
    %1552 = vmatpush.bf16.msra.mxu0 %v1226
    %1553 = vmatpush.bf16.msra.mxu0 %v1222
    %1554 = vmatpush.bf16.msra.mxu0 %v1218
    %1555 = vmatpush.bf16.msra.mxu0 %v1214
    %1556 = vmatmul.bf16.gmra.mxu0 %v342
    %v1557 = vpop.f32.mrf.mxu0
    %v1558 = vadd.f32 %v1545, %v1557
    %v1559 = vpop.f32.mrf.mxu0
    %1560 = vdwg.mxu0
    %1561 = vmatpush.bf16.msra.mxu0 %v1051
    %1562 = vmatpush.bf16.msra.mxu0 %v1047
    %1563 = vmatpush.bf16.msra.mxu0 %v1043
    %1564 = vmatpush.bf16.msra.mxu0 %v1039
    %1565 = vmatpush.bf16.msra.mxu0 %v1035
    %1566 = vmatpush.bf16.msra.mxu0 %v1031
    %1567 = vmatpush.bf16.msra.mxu0 %v1027
    %1568 = vmatpush.bf16.msra.mxu0 %v1023
    %1569 = vmatmul.bf16.gmra.mxu0 %v336
    %v1570 = vpop.f32.mrf.mxu0
    %v1571 = vadd.f32 %v318, %v1570
    %v1572 = vpop.f32.mrf.mxu0
    %1573 = vdwg.mxu0
    %1574 = vmatpush.bf16.msra.mxu0 %v1083
    %1575 = vmatpush.bf16.msra.mxu0 %v1079
    %1576 = vmatpush.bf16.msra.mxu0 %v1075
    %1577 = vmatpush.bf16.msra.mxu0 %v1071
    %1578 = vmatpush.bf16.msra.mxu0 %v1067
    %1579 = vmatpush.bf16.msra.mxu0 %v1063
    %1580 = vmatpush.bf16.msra.mxu0 %v1059
    %1581 = vmatpush.bf16.msra.mxu0 %v1055
    %1582 = vmatmul.bf16.gmra.mxu0 %v337
    %v1583 = vpop.f32.mrf.mxu0
    %v1584 = vadd.f32 %v1571, %v1583
    %v1585 = vpop.f32.mrf.mxu0
    %1586 = vdwg.mxu0
    %1587 = vmatpush.bf16.msra.mxu0 %v1115
    %1588 = vmatpush.bf16.msra.mxu0 %v1111
    %1589 = vmatpush.bf16.msra.mxu0 %v1107
    %1590 = vmatpush.bf16.msra.mxu0 %v1103
    %1591 = vmatpush.bf16.msra.mxu0 %v1099
    %1592 = vmatpush.bf16.msra.mxu0 %v1095
    %1593 = vmatpush.bf16.msra.mxu0 %v1091
    %1594 = vmatpush.bf16.msra.mxu0 %v1087
    %1595 = vmatmul.bf16.gmra.mxu0 %v338
    %v1596 = vpop.f32.mrf.mxu0
    %v1597 = vadd.f32 %v1584, %v1596
    %v1598 = vpop.f32.mrf.mxu0
    %1599 = vdwg.mxu0
    %1600 = vmatpush.bf16.msra.mxu0 %v1147
    %1601 = vmatpush.bf16.msra.mxu0 %v1143
    %1602 = vmatpush.bf16.msra.mxu0 %v1139
    %1603 = vmatpush.bf16.msra.mxu0 %v1135
    %1604 = vmatpush.bf16.msra.mxu0 %v1131
    %1605 = vmatpush.bf16.msra.mxu0 %v1127
    %1606 = vmatpush.bf16.msra.mxu0 %v1123
    %1607 = vmatpush.bf16.msra.mxu0 %v1119
    %1608 = vmatmul.bf16.gmra.mxu0 %v339
    %v1609 = vpop.f32.mrf.mxu0
    %v1610 = vadd.f32 %v1597, %v1609
    %v1611 = vpop.f32.mrf.mxu0
    %1612 = vdwg.mxu0
    %1613 = vmatpush.bf16.msra.mxu0 %v1179
    %1614 = vmatpush.bf16.msra.mxu0 %v1175
    %1615 = vmatpush.bf16.msra.mxu0 %v1171
    %1616 = vmatpush.bf16.msra.mxu0 %v1167
    %1617 = vmatpush.bf16.msra.mxu0 %v1163
    %1618 = vmatpush.bf16.msra.mxu0 %v1159
    %1619 = vmatpush.bf16.msra.mxu0 %v1155
    %1620 = vmatpush.bf16.msra.mxu0 %v1151
    %1621 = vmatmul.bf16.gmra.mxu0 %v340
    %v1622 = vpop.f32.mrf.mxu0
    %v1623 = vadd.f32 %v1610, %v1622
    %v1624 = vpop.f32.mrf.mxu0
    %1625 = vdwg.mxu0
    %1626 = vmatpush.bf16.msra.mxu0 %v1211
    %1627 = vmatpush.bf16.msra.mxu0 %v1207
    %1628 = vmatpush.bf16.msra.mxu0 %v1203
    %1629 = vmatpush.bf16.msra.mxu0 %v1199
    %1630 = vmatpush.bf16.msra.mxu0 %v1195
    %1631 = vmatpush.bf16.msra.mxu0 %v1191
    %1632 = vmatpush.bf16.msra.mxu0 %v1187
    %1633 = vmatpush.bf16.msra.mxu0 %v1183
    %1634 = vmatmul.bf16.gmra.mxu0 %v341
    %v1635 = vpop.f32.mrf.mxu0
    %v1636 = vadd.f32 %v1623, %v1635
    %v1637 = vpop.f32.mrf.mxu0
    %1638 = vdwg.mxu0
    %1639 = vmatpush.bf16.msra.mxu0 %v1243
    %1640 = vmatpush.bf16.msra.mxu0 %v1239
    %1641 = vmatpush.bf16.msra.mxu0 %v1235
    %1642 = vmatpush.bf16.msra.mxu0 %v1231
    %1643 = vmatpush.bf16.msra.mxu0 %v1227
    %1644 = vmatpush.bf16.msra.mxu0 %v1223
    %1645 = vmatpush.bf16.msra.mxu0 %v1219
    %1646 = vmatpush.bf16.msra.mxu0 %v1215
    %1647 = vmatmul.bf16.gmra.mxu0 %v342
    %v1648 = vpop.f32.mrf.mxu0
    %v1649 = vadd.f32 %v1636, %v1648
    %v1650 = vpop.f32.mrf.mxu0
    %1651 = vdwg.mxu0
    %1652 = vmatpush.bf16.msra.mxu0 %v1052
    %1653 = vmatpush.bf16.msra.mxu0 %v1048
    %1654 = vmatpush.bf16.msra.mxu0 %v1044
    %1655 = vmatpush.bf16.msra.mxu0 %v1040
    %1656 = vmatpush.bf16.msra.mxu0 %v1036
    %1657 = vmatpush.bf16.msra.mxu0 %v1032
    %1658 = vmatpush.bf16.msra.mxu0 %v1028
    %1659 = vmatpush.bf16.msra.mxu0 %v1024
    %1660 = vmatmul.bf16.gmra.mxu0 %v336
    %v1661 = vpop.f32.mrf.mxu0
    %v1662 = vadd.f32 %v319, %v1661
    %v1663 = vpop.f32.mrf.mxu0
    %1664 = vdwg.mxu0
    %1665 = vmatpush.bf16.msra.mxu0 %v1084
    %1666 = vmatpush.bf16.msra.mxu0 %v1080
    %1667 = vmatpush.bf16.msra.mxu0 %v1076
    %1668 = vmatpush.bf16.msra.mxu0 %v1072
    %1669 = vmatpush.bf16.msra.mxu0 %v1068
    %1670 = vmatpush.bf16.msra.mxu0 %v1064
    %1671 = vmatpush.bf16.msra.mxu0 %v1060
    %1672 = vmatpush.bf16.msra.mxu0 %v1056
    %1673 = vmatmul.bf16.gmra.mxu0 %v337
    %v1674 = vpop.f32.mrf.mxu0
    %v1675 = vadd.f32 %v1662, %v1674
    %v1676 = vpop.f32.mrf.mxu0
    %1677 = vdwg.mxu0
    %1678 = vmatpush.bf16.msra.mxu0 %v1116
    %1679 = vmatpush.bf16.msra.mxu0 %v1112
    %1680 = vmatpush.bf16.msra.mxu0 %v1108
    %1681 = vmatpush.bf16.msra.mxu0 %v1104
    %1682 = vmatpush.bf16.msra.mxu0 %v1100
    %1683 = vmatpush.bf16.msra.mxu0 %v1096
    %1684 = vmatpush.bf16.msra.mxu0 %v1092
    %1685 = vmatpush.bf16.msra.mxu0 %v1088
    %1686 = vmatmul.bf16.gmra.mxu0 %v338
    %v1687 = vpop.f32.mrf.mxu0
    %v1688 = vadd.f32 %v1675, %v1687
    %v1689 = vpop.f32.mrf.mxu0
    %1690 = vdwg.mxu0
    %1691 = vmatpush.bf16.msra.mxu0 %v1148
    %1692 = vmatpush.bf16.msra.mxu0 %v1144
    %1693 = vmatpush.bf16.msra.mxu0 %v1140
    %1694 = vmatpush.bf16.msra.mxu0 %v1136
    %1695 = vmatpush.bf16.msra.mxu0 %v1132
    %1696 = vmatpush.bf16.msra.mxu0 %v1128
    %1697 = vmatpush.bf16.msra.mxu0 %v1124
    %1698 = vmatpush.bf16.msra.mxu0 %v1120
    %1699 = vmatmul.bf16.gmra.mxu0 %v339
    %v1700 = vpop.f32.mrf.mxu0
    %v1701 = vadd.f32 %v1688, %v1700
    %v1702 = vpop.f32.mrf.mxu0
    %1703 = vdwg.mxu0
    %1704 = vmatpush.bf16.msra.mxu0 %v1180
    %1705 = vmatpush.bf16.msra.mxu0 %v1176
    %1706 = vmatpush.bf16.msra.mxu0 %v1172
    %1707 = vmatpush.bf16.msra.mxu0 %v1168
    %1708 = vmatpush.bf16.msra.mxu0 %v1164
    %1709 = vmatpush.bf16.msra.mxu0 %v1160
    %1710 = vmatpush.bf16.msra.mxu0 %v1156
    %1711 = vmatpush.bf16.msra.mxu0 %v1152
    %1712 = vmatmul.bf16.gmra.mxu0 %v340
    %v1713 = vpop.f32.mrf.mxu0
    %v1714 = vadd.f32 %v1701, %v1713
    %v1715 = vpop.f32.mrf.mxu0
    %1716 = vdwg.mxu0
    %1717 = vmatpush.bf16.msra.mxu0 %v1212
    %1718 = vmatpush.bf16.msra.mxu0 %v1208
    %1719 = vmatpush.bf16.msra.mxu0 %v1204
    %1720 = vmatpush.bf16.msra.mxu0 %v1200
    %1721 = vmatpush.bf16.msra.mxu0 %v1196
    %1722 = vmatpush.bf16.msra.mxu0 %v1192
    %1723 = vmatpush.bf16.msra.mxu0 %v1188
    %1724 = vmatpush.bf16.msra.mxu0 %v1184
    %1725 = vmatmul.bf16.gmra.mxu0 %v341
    %v1726 = vpop.f32.mrf.mxu0
    %v1727 = vadd.f32 %v1714, %v1726
    %v1728 = vpop.f32.mrf.mxu0
    %1729 = vdwg.mxu0
    %1730 = vmatpush.bf16.msra.mxu0 %v1244
    %1731 = vmatpush.bf16.msra.mxu0 %v1240
    %1732 = vmatpush.bf16.msra.mxu0 %v1236
    %1733 = vmatpush.bf16.msra.mxu0 %v1232
    %1734 = vmatpush.bf16.msra.mxu0 %v1228
    %1735 = vmatpush.bf16.msra.mxu0 %v1224
    %1736 = vmatpush.bf16.msra.mxu0 %v1220
    %1737 = vmatpush.bf16.msra.mxu0 %v1216
    %1738 = vmatmul.bf16.gmra.mxu0 %v342
    %v1739 = vpop.f32.mrf.mxu0
    %v1740 = vadd.f32 %v1727, %v1739
    %v1741 = vpop.f32.mrf.mxu0
    %1742 = vdwg.mxu0
    %1743 = vmatpush.bf16.msra.mxu0 %v1053
    %1744 = vmatpush.bf16.msra.mxu0 %v1049
    %1745 = vmatpush.bf16.msra.mxu0 %v1045
    %1746 = vmatpush.bf16.msra.mxu0 %v1041
    %1747 = vmatpush.bf16.msra.mxu0 %v1037
    %1748 = vmatpush.bf16.msra.mxu0 %v1033
    %1749 = vmatpush.bf16.msra.mxu0 %v1029
    %1750 = vmatpush.bf16.msra.mxu0 %v1025
    %1751 = vmatmul.bf16.gmra.mxu0 %v336
    %v1752 = vpop.f32.mrf.mxu0
    %v1753 = vadd.f32 %v320, %v1752
    %v1754 = vpop.f32.mrf.mxu0
    %1755 = vdwg.mxu0
    %1756 = vmatpush.bf16.msra.mxu0 %v1085
    %1757 = vmatpush.bf16.msra.mxu0 %v1081
    %1758 = vmatpush.bf16.msra.mxu0 %v1077
    %1759 = vmatpush.bf16.msra.mxu0 %v1073
    %1760 = vmatpush.bf16.msra.mxu0 %v1069
    %1761 = vmatpush.bf16.msra.mxu0 %v1065
    %1762 = vmatpush.bf16.msra.mxu0 %v1061
    %1763 = vmatpush.bf16.msra.mxu0 %v1057
    %1764 = vmatmul.bf16.gmra.mxu0 %v337
    %v1765 = vpop.f32.mrf.mxu0
    %v1766 = vadd.f32 %v1753, %v1765
    %v1767 = vpop.f32.mrf.mxu0
    %1768 = vdwg.mxu0
    %1769 = vmatpush.bf16.msra.mxu0 %v1117
    %1770 = vmatpush.bf16.msra.mxu0 %v1113
    %1771 = vmatpush.bf16.msra.mxu0 %v1109
    %1772 = vmatpush.bf16.msra.mxu0 %v1105
    %1773 = vmatpush.bf16.msra.mxu0 %v1101
    %1774 = vmatpush.bf16.msra.mxu0 %v1097
    %1775 = vmatpush.bf16.msra.mxu0 %v1093
    %1776 = vmatpush.bf16.msra.mxu0 %v1089
    %1777 = vmatmul.bf16.gmra.mxu0 %v338
    %v1778 = vpop.f32.mrf.mxu0
    %v1779 = vadd.f32 %v1766, %v1778
    %v1780 = vpop.f32.mrf.mxu0
    %1781 = vdwg.mxu0
    %1782 = vmatpush.bf16.msra.mxu0 %v1149
    %1783 = vmatpush.bf16.msra.mxu0 %v1145
    %1784 = vmatpush.bf16.msra.mxu0 %v1141
    %1785 = vmatpush.bf16.msra.mxu0 %v1137
    %1786 = vmatpush.bf16.msra.mxu0 %v1133
    %1787 = vmatpush.bf16.msra.mxu0 %v1129
    %1788 = vmatpush.bf16.msra.mxu0 %v1125
    %1789 = vmatpush.bf16.msra.mxu0 %v1121
    %1790 = vmatmul.bf16.gmra.mxu0 %v339
    %v1791 = vpop.f32.mrf.mxu0
    %v1792 = vadd.f32 %v1779, %v1791
    %v1793 = vpop.f32.mrf.mxu0
    %1794 = vdwg.mxu0
    %1795 = vmatpush.bf16.msra.mxu0 %v1181
    %1796 = vmatpush.bf16.msra.mxu0 %v1177
    %1797 = vmatpush.bf16.msra.mxu0 %v1173
    %1798 = vmatpush.bf16.msra.mxu0 %v1169
    %1799 = vmatpush.bf16.msra.mxu0 %v1165
    %1800 = vmatpush.bf16.msra.mxu0 %v1161
    %1801 = vmatpush.bf16.msra.mxu0 %v1157
    %1802 = vmatpush.bf16.msra.mxu0 %v1153
    %1803 = vmatmul.bf16.gmra.mxu0 %v340
    %v1804 = vpop.f32.mrf.mxu0
    %v1805 = vadd.f32 %v1792, %v1804
    %v1806 = vpop.f32.mrf.mxu0
    %1807 = vdwg.mxu0
    %1808 = vmatpush.bf16.msra.mxu0 %v1213
    %1809 = vmatpush.bf16.msra.mxu0 %v1209
    %1810 = vmatpush.bf16.msra.mxu0 %v1205
    %1811 = vmatpush.bf16.msra.mxu0 %v1201
    %1812 = vmatpush.bf16.msra.mxu0 %v1197
    %1813 = vmatpush.bf16.msra.mxu0 %v1193
    %1814 = vmatpush.bf16.msra.mxu0 %v1189
    %1815 = vmatpush.bf16.msra.mxu0 %v1185
    %1816 = vmatmul.bf16.gmra.mxu0 %v341
    %v1817 = vpop.f32.mrf.mxu0
    %v1818 = vadd.f32 %v1805, %v1817
    %v1819 = vpop.f32.mrf.mxu0
    %1820 = vdwg.mxu0
    %1821 = vmatpush.bf16.msra.mxu0 %v1245
    %1822 = vmatpush.bf16.msra.mxu0 %v1241
    %1823 = vmatpush.bf16.msra.mxu0 %v1237
    %1824 = vmatpush.bf16.msra.mxu0 %v1233
    %1825 = vmatpush.bf16.msra.mxu0 %v1229
    %1826 = vmatpush.bf16.msra.mxu0 %v1225
    %1827 = vmatpush.bf16.msra.mxu0 %v1221
    %1828 = vmatpush.bf16.msra.mxu0 %v1217
    %1829 = vmatmul.bf16.gmra.mxu0 %v342
    %v1830 = vpop.f32.mrf.mxu0
    %v1831 = vadd.f32 %v1818, %v1830
    %v1832 = vpop.f32.mrf.mxu0
    %1833 = vdwg.mxu0
    %v1834 = vmax.f32 %v1558, 0.0
    %v1835 = vmax.f32 %v1649, 0.0
    %v1836 = vmax.f32 %v1740, 0.0
    %v1837 = vmax.f32 %v1831, 0.0
    %v1838 = vpack.c.bf16 %v1834, %v1834
    %v1839 = vpack.c.bf16 %v1835, %v1835
    %v1840 = vpack.c.bf16 %v1836, %v1836
    %v1841 = vpack.c.bf16 %v1837, %v1837
    %v1842 = vld [vmem:[#allocation8] sm:$0xf]
    %v1843 = vld [vmem:[#allocation8 + $0x4] sm:$0xf]
    %v1844 = vld [vmem:[#allocation8 + $0x8] sm:$0xf]
    %v1845 = vld [vmem:[#allocation8 + $0xc] sm:$0xf]
    %v1846 = vld [vmem:[#allocation8 + $0x10] sm:$0xf]
    %v1847 = vld [vmem:[#allocation8 + $0x14] sm:$0xf]
    %v1848 = vld [vmem:[#allocation8 + $0x18] sm:$0xf]
    %v1849 = vld [vmem:[#allocation8 + $0x1c] sm:$0xf]
    %v1850 = vld [vmem:[#allocation8 + $0x20] sm:$0xf]
    %v1851 = vld [vmem:[#allocation8 + $0x24] sm:$0xf]
    %v1852 = vld [vmem:[#allocation8 + $0x28] sm:$0xf]
    %v1853 = vld [vmem:[#allocation8 + $0x2c] sm:$0xf]
    %v1854 = vld [vmem:[#allocation8 + $0x30] sm:$0xf]
    %v1855 = vld [vmem:[#allocation8 + $0x34] sm:$0xf]
    %v1856 = vld [vmem:[#allocation8 + $0x38] sm:$0xf]
    %v1857 = vld [vmem:[#allocation8 + $0x3c] sm:$0xf]
    %v1858 = vld [vmem:[#allocation8 + $0x40] sm:$0xf]
    %v1859 = vld [vmem:[#allocation8 + $0x44] sm:$0xf]
    %v1860 = vld [vmem:[#allocation8 + $0x48] sm:$0xf]
    %v1861 = vld [vmem:[#allocation8 + $0x4c] sm:$0xf]
    %v1862 = vld [vmem:[#allocation8 + $0x50] sm:$0xf]
    %v1863 = vld [vmem:[#allocation8 + $0x54] sm:$0xf]
    %v1864 = vld [vmem:[#allocation8 + $0x58] sm:$0xf]
    %v1865 = vld [vmem:[#allocation8 + $0x5c] sm:$0xf]
    %v1866 = vld [vmem:[#allocation8 + $0x60] sm:$0xf]
    %v1867 = vld [vmem:[#allocation8 + $0x64] sm:$0xf]
    %v1868 = vld [vmem:[#allocation8 + $0x68] sm:$0xf]
    %v1869 = vld [vmem:[#allocation8 + $0x6c] sm:$0xf]
    %v1870 = vld [vmem:[#allocation8 + $0x70] sm:$0xf]
    %v1871 = vld [vmem:[#allocation8 + $0x74] sm:$0xf]
    %v1872 = vld [vmem:[#allocation8 + $0x78] sm:$0xf]
    %v1873 = vld [vmem:[#allocation8 + $0x7c] sm:$0xf]
    %v1874 = vld [vmem:[#allocation8 + $0x80] sm:$0xf]
    %v1875 = vld [vmem:[#allocation8 + $0x84] sm:$0xf]
    %v1876 = vld [vmem:[#allocation8 + $0x88] sm:$0xf]
    %v1877 = vld [vmem:[#allocation8 + $0x8c] sm:$0xf]
    %v1878 = vld [vmem:[#allocation8 + $0x90] sm:$0xf]
    %v1879 = vld [vmem:[#allocation8 + $0x94] sm:$0xf]
    %v1880 = vld [vmem:[#allocation8 + $0x98] sm:$0xf]
    %v1881 = vld [vmem:[#allocation8 + $0x9c] sm:$0xf]
    %v1882 = vld [vmem:[#allocation8 + $0xa0] sm:$0xf]
    %v1883 = vld [vmem:[#allocation8 + $0xa4] sm:$0xf]
    %v1884 = vld [vmem:[#allocation8 + $0xa8] sm:$0xf]
    %v1885 = vld [vmem:[#allocation8 + $0xac] sm:$0xf]
    %v1886 = vld [vmem:[#allocation8 + $0xb0] sm:$0xf]
    %v1887 = vld [vmem:[#allocation8 + $0xb4] sm:$0xf]
    %v1888 = vld [vmem:[#allocation8 + $0xb8] sm:$0xf]
    %v1889 = vld [vmem:[#allocation8 + $0xbc] sm:$0xf]
    %v1890 = vld [vmem:[#allocation8 + $0xc0] sm:$0xf]
    %v1891 = vld [vmem:[#allocation8 + $0xc4] sm:$0xf]
    %v1892 = vld [vmem:[#allocation8 + $0xc8] sm:$0xf]
    %v1893 = vld [vmem:[#allocation8 + $0xcc] sm:$0xf]
    %v1894 = vld [vmem:[#allocation8 + $0xd0] sm:$0xf]
    %v1895 = vld [vmem:[#allocation8 + $0xd4] sm:$0xf]
    %v1896 = vld [vmem:[#allocation8 + $0xd8] sm:$0xf]
    %v1897 = vld [vmem:[#allocation8 + $0xdc] sm:$0xf]
    %v1898 = vld [vmem:[#allocation8 + $0xe0] sm:$0xf]
    %v1899 = vld [vmem:[#allocation8 + $0xe4] sm:$0xf]
    %v1900 = vld [vmem:[#allocation8 + $0xe8] sm:$0xf]
    %v1901 = vld [vmem:[#allocation8 + $0xec] sm:$0xf]
    %v1902 = vld [vmem:[#allocation8 + $0xf0] sm:$0xf]
    %v1903 = vld [vmem:[#allocation8 + $0xf4] sm:$0xf]
    %v1904 = vld [vmem:[#allocation8 + $0xf8] sm:$0xf]
    %v1905 = vld [vmem:[#allocation8 + $0xfc] sm:$0xf]
    %v1906 = vld [vmem:[%s4] sm:$0x1]
    %v1908 = vperm.slane %v1906, 0
    %v1974 = vunpack.c.l.b16 %v1842
    %v1975 = vunpack.c.l.b16 %v1843
    %v1976 = vunpack.c.l.b16 %v1844
    %v1977 = vunpack.c.l.b16 %v1845
    %v1978 = vunpack.c.l.b16 %v1846
    %v1979 = vunpack.c.l.b16 %v1847
    %v1980 = vunpack.c.l.b16 %v1848
    %v1981 = vunpack.c.l.b16 %v1849
    %v1982 = vunpack.c.l.b16 %v1850
    %v1983 = vunpack.c.l.b16 %v1851
    %v1984 = vunpack.c.l.b16 %v1852
    %v1985 = vunpack.c.l.b16 %v1853
    %v1986 = vunpack.c.l.b16 %v1854
    %v1987 = vunpack.c.l.b16 %v1855
    %v1988 = vunpack.c.l.b16 %v1856
    %v1989 = vunpack.c.l.b16 %v1857
    %v1990 = vunpack.c.l.b16 %v1858
    %v1991 = vunpack.c.l.b16 %v1859
    %v1992 = vunpack.c.l.b16 %v1860
    %v1993 = vunpack.c.l.b16 %v1861
    %v1994 = vunpack.c.l.b16 %v1862
    %v1995 = vunpack.c.l.b16 %v1863
    %v1996 = vunpack.c.l.b16 %v1864
    %v1997 = vunpack.c.l.b16 %v1865
    %v1998 = vunpack.c.l.b16 %v1866
    %v1999 = vunpack.c.l.b16 %v1867
    %v2000 = vunpack.c.l.b16 %v1868
    %v2001 = vunpack.c.l.b16 %v1869
    %v2002 = vunpack.c.l.b16 %v1870
    %v2003 = vunpack.c.l.b16 %v1871
    %v2004 = vunpack.c.l.b16 %v1872
    %v2005 = vunpack.c.l.b16 %v1873
    %v2006 = vunpack.c.l.b16 %v1874
    %v2007 = vunpack.c.l.b16 %v1875
    %v2008 = vunpack.c.l.b16 %v1876
    %v2009 = vunpack.c.l.b16 %v1877
    %v2010 = vunpack.c.l.b16 %v1878
    %v2011 = vunpack.c.l.b16 %v1879
    %v2012 = vunpack.c.l.b16 %v1880
    %v2013 = vunpack.c.l.b16 %v1881
    %v2014 = vunpack.c.l.b16 %v1882
    %v2015 = vunpack.c.l.b16 %v1883
    %v2016 = vunpack.c.l.b16 %v1884
    %v2017 = vunpack.c.l.b16 %v1885
    %v2018 = vunpack.c.l.b16 %v1886
    %v2019 = vunpack.c.l.b16 %v1887
    %v2020 = vunpack.c.l.b16 %v1888
    %v2021 = vunpack.c.l.b16 %v1889
    %v2022 = vunpack.c.l.b16 %v1890
    %v2023 = vunpack.c.l.b16 %v1891
    %v2024 = vunpack.c.l.b16 %v1892
    %v2025 = vunpack.c.l.b16 %v1893
    %v2026 = vunpack.c.l.b16 %v1894
    %v2027 = vunpack.c.l.b16 %v1895
    %v2028 = vunpack.c.l.b16 %v1896
    %v2029 = vunpack.c.l.b16 %v1897
    %v2030 = vunpack.c.l.b16 %v1898
    %v2031 = vunpack.c.l.b16 %v1899
    %v2032 = vunpack.c.l.b16 %v1900
    %v2033 = vunpack.c.l.b16 %v1901
    %v2034 = vunpack.c.l.b16 %v1902
    %v2035 = vunpack.c.l.b16 %v1903
    %v2036 = vunpack.c.l.b16 %v1904
    %v2037 = vunpack.c.l.b16 %v1905
    %v2038 = vpack.c.b16 %v1975, %v1974
    %v2039 = vpack.c.b16 %v1977, %v1976
    %v2040 = vpack.c.b16 %v1979, %v1978
    %v2041 = vpack.c.b16 %v1981, %v1980
    %v2042 = vpack.c.b16 %v1983, %v1982
    %v2043 = vpack.c.b16 %v1985, %v1984
    %v2044 = vpack.c.b16 %v1987, %v1986
    %v2045 = vpack.c.b16 %v1989, %v1988
    %v2046 = vpack.c.b16 %v1991, %v1990
    %v2047 = vpack.c.b16 %v1993, %v1992
    %v2048 = vpack.c.b16 %v1995, %v1994
    %v2049 = vpack.c.b16 %v1997, %v1996
    %v2050 = vpack.c.b16 %v1999, %v1998
    %v2051 = vpack.c.b16 %v2001, %v2000
    %v2052 = vpack.c.b16 %v2003, %v2002
    %v2053 = vpack.c.b16 %v2005, %v2004
    %v2054 = vpack.c.b16 %v2007, %v2006
    %v2055 = vpack.c.b16 %v2009, %v2008
    %v2056 = vpack.c.b16 %v2011, %v2010
    %v2057 = vpack.c.b16 %v2013, %v2012
    %v2058 = vpack.c.b16 %v2015, %v2014
    %v2059 = vpack.c.b16 %v2017, %v2016
    %v2060 = vpack.c.b16 %v2019, %v2018
    %v2061 = vpack.c.b16 %v2021, %v2020
    %v2062 = vpack.c.b16 %v2023, %v2022
    %v2063 = vpack.c.b16 %v2025, %v2024
    %v2064 = vpack.c.b16 %v2027, %v2026
    %v2065 = vpack.c.b16 %v2029, %v2028
    %v2066 = vpack.c.b16 %v2031, %v2030
    %v2067 = vpack.c.b16 %v2033, %v2032
    %v2068 = vpack.c.b16 %v2035, %v2034
    %v2069 = vpack.c.b16 %v2037, %v2036
    %2102 = vmatpush.bf16.msra.mxu0 %v2045
    %2103 = vmatpush.bf16.msra.mxu0 %v2044
    %2104 = vmatpush.bf16.msra.mxu0 %v2043
    %2105 = vmatpush.bf16.msra.mxu0 %v2042
    %2106 = vmatpush.bf16.msra.mxu0 %v2041
    %2107 = vmatpush.bf16.msra.mxu0 %v2040
    %2108 = vmatpush.bf16.msra.mxu0 %v2039
    %2109 = vmatpush.bf16.msra.mxu0 %v2038
    %2110 = vmatmul.bf16.gmra.mxu0 %v1838
    %v2111 = vpop.f32.mrf.mxu0
    %v2112 = vadd.f32 %v1908, %v2111
    %v2113 = vpop.f32.mrf.mxu0
    %2114 = vdwg.mxu0
    %2115 = vmatpush.bf16.msra.mxu0 %v2053
    %2116 = vmatpush.bf16.msra.mxu0 %v2052
    %2117 = vmatpush.bf16.msra.mxu0 %v2051
    %2118 = vmatpush.bf16.msra.mxu0 %v2050
    %2119 = vmatpush.bf16.msra.mxu0 %v2049
    %2120 = vmatpush.bf16.msra.mxu0 %v2048
    %2121 = vmatpush.bf16.msra.mxu0 %v2047
    %2122 = vmatpush.bf16.msra.mxu0 %v2046
    %2123 = vmatmul.bf16.gmra.mxu0 %v1839
    %v2124 = vpop.f32.mrf.mxu0
    %v2125 = vadd.f32 %v2112, %v2124
    %v2126 = vpop.f32.mrf.mxu0
    %2127 = vdwg.mxu0
    %2128 = vmatpush.bf16.msra.mxu0 %v2061
    %2129 = vmatpush.bf16.msra.mxu0 %v2060
    %2130 = vmatpush.bf16.msra.mxu0 %v2059
    %2131 = vmatpush.bf16.msra.mxu0 %v2058
    %2132 = vmatpush.bf16.msra.mxu0 %v2057
    %2133 = vmatpush.bf16.msra.mxu0 %v2056
    %2134 = vmatpush.bf16.msra.mxu0 %v2055
    %2135 = vmatpush.bf16.msra.mxu0 %v2054
    %2136 = vmatmul.bf16.gmra.mxu0 %v1840
    %v2137 = vpop.f32.mrf.mxu0
    %v2138 = vadd.f32 %v2125, %v2137
    %v2139 = vpop.f32.mrf.mxu0
    %2140 = vdwg.mxu0
    %2141 = vmatpush.bf16.msra.mxu0 %v2069
    %2142 = vmatpush.bf16.msra.mxu0 %v2068
    %2143 = vmatpush.bf16.msra.mxu0 %v2067
    %2144 = vmatpush.bf16.msra.mxu0 %v2066
    %2145 = vmatpush.bf16.msra.mxu0 %v2065
    %2146 = vmatpush.bf16.msra.mxu0 %v2064
    %2147 = vmatpush.bf16.msra.mxu0 %v2063
    %2148 = vmatpush.bf16.msra.mxu0 %v2062
    %2149 = vmatmul.bf16.gmra.mxu0 %v1841
    %v2150 = vpop.f32.mrf.mxu0
    %v2151 = vadd.f32 %v2138, %v2150
    %v2152 = vpop.f32.mrf.mxu0
    %2153 = vdwg.mxu0
    %v2154 = vmax.f32 %v2151, 0.0
    %v2155 = vld [vmem:[%s5] sm:$0x1]
    %v2156 = vunpack.c.l.bf16 %v2155
    %v2157 = vperm.slane %v2156, 0
    %v2158 = vmul.f32 %v2154, %v2157
    %2159 = vadd.xlane.f32.xlu0 %v2158
    %v2160 = vpop.xlane.xlu0 %2159
    %v2161 = vld [vmem:[#allocation2] sm:$0x1]
    %v2163 = vperm.slane %v2161, 0
    %v2165 = vadd.f32 %v2160, %v2163
    %v2166 = vxor.u32 %v2165, 2147483648
    %v2167 = vmul.f32 %v2166, 1.442695
    %v2168 = vpow.pop %v2167
    %v2169 = vadd.f32 %v2168, 1.0
    %v2170 = vrcp.pop %v2169
    %v2171 = vmul.f32 %v2169, %v2170
    %v2172 = vsub.f32 1.0, %v2171
    %v2173 = vmul.f32 %v2170, %v2172
    %v2174 = vadd.f32 %v2170, %v2173
    %vm2175 = vweird.f32 %v2169
    %vm2176 = vweird.f32 %v2170
    %vm2177 = vmor %vm2175, %vm2176
    %v2178 = vsel %vm2177, %v2170, %v2174
    %v2179 = vand.u32 2147483647, %v2169
    %vm2180 = vcmp.eq.f32.partialorder %v2179, 8.507059e+37
    %v2181 = vand.u32 %v2169, 2147483648
    %v2182 = vor.u32 1.1754944e-38, %v2181
    %v2183 = vsel %vm2180, %v2182, %v2178
    %v2184 = vmul.f32 1.0, %v2183
    %vm2185 = vcmask 7168
    %2186 = vst.msk [vmem:[%s7] sm:$0xff] %vm2185, %v2184
    // Predicated region
    $region46: #{tpu_custom_call.1} parent=1 // pred_check
      _
    $region47: #{tpu_custom_call.1} parent=1 // pred_check_branch
      %2188 = sbr.rel (0) target = $region49
    $region48: #{tpu_custom_call.1} parent=1 // pred_region
      _
    $region49: #{tpu_custom_call.1} parent=1 // pred_fallthru
      _
    // Predicated region
    $region50: #{tpu_custom_call.1} parent=1 // pred_check
      _
    $region51: #{tpu_custom_call.1} parent=1 // pred_check_branch
      %2190 = sbr.rel (0) target = $region53
    $region52: #{tpu_custom_call.1} parent=1 // pred_region
      _
    $region53: #{tpu_custom_call.1} parent=1 // pred_fallthru
      _
    %2191 = vsyncpa [#allocation4], 1
    %2192 = vsyncpa [#allocation6], 1
    %2193 = vsyncpa [#allocation9], 1

</llo_original>
